<compile_context>
chip_gen: v7x
topology: tpu7x:2x2x1
jax: 0.10.0
libtpu: 0.0.40
codegen_flags: <defaults>
</compile_context>

<pallas_src>
import functools

import jax
import jax.numpy as jnp
from jax.experimental import pallas as pl
from jax.experimental.pallas import tpu as pltpu


def _round_up(x, m):
    return ((x + m - 1) // m) * m


def loss_predictor_kernel(prm_ref, xts_ref, xs_ref, logp_ref, h_ref, *,
                          C, S, H1, P, T, b_lim, h_lim, freq_scale,
                          transpose_h):
    # Static offsets into the flat SMEM parameter vector (scalar-prefetched).
    o_w1ts = 0                      # (C, H1) row-major
    o_w1sc = o_w1ts + C * H1        # (S, H1)
    o_b1   = o_w1sc + S * H1        # (H1,)
    o_w2   = o_b1 + H1              # (H1,)
    o_b2   = o_w2 + H1              # (1,)
    o_wp1  = o_b2 + 1               # (S, P)
    o_bp1  = o_wp1 + S * P          # (P,)
    o_wp2  = o_bp1 + P              # (P,)
    o_bp2  = o_wp2 + P              # (1,)

    xs = xs_ref[...].astype(jnp.float32)                          # (TB, S)

    # Channel planes: x_ts arrives pre-flattened as (TB, C*T), so each channel
    # is a dense lane-contiguous slice (no sublane-strided relayout, no 4->8
    # sublane padding).  Upcast handles an optional bf16 DMA dtype.
    x_ch = [xts_ref[:, c * T:(c + 1) * T].astype(jnp.float32) for c in range(C)]

    # ---------------- synthetic h_predictor: pure VPU/EUP ----------------
    # (C*H1 = 32 is far below the MXU crossover; if C*H1 grows past ~32-64,
    # switch to one jnp.dot on a (TB*T, C) x (C, H1) reshape instead.)
    h_acc = None
    for h in range(H1):
        acc = x_ch[0] * prm_ref[o_w1ts + h]                       # (TB, T)
        for c in range(1, C):
            acc = acc + x_ch[c] * prm_ref[o_w1ts + c * H1 + h]
        sc = xs[:, 0:1] * prm_ref[o_w1sc + h]                     # (TB, 1)
        for s in range(1, S):
            sc = sc + xs[:, s:s + 1] * prm_ref[o_w1sc + s * H1 + h]
        sc = sc + prm_ref[o_b1 + h]                               # bias folded on (TB,1)
        hid = jnp.tanh(acc + sc)                                  # one full-width add
        term = hid * prm_ref[o_w2 + h]
        h_acc = term if h_acc is None else h_acc + term
    h_raw = jnp.tanh(h_acc + prm_ref[o_b2])                       # (TB, T)

    # ---------------- post_processor: Linear(S,P) -> tanh -> Linear(P,1) -> tanh
    pp_acc = None
    for j in range(P):
        a = xs[:, 0:1] * prm_ref[o_wp1 + j]                       # (TB, 1)
        for s in range(1, S):
            a = a + xs[:, s:s + 1] * prm_ref[o_wp1 + s * P + j]
        p1j = jnp.tanh(a + prm_ref[o_bp1 + j])
        term = p1j * prm_ref[o_wp2 + j]
        pp_acc = term if pp_acc is None else pp_acc + term
    pp = jnp.tanh(pp_acc + prm_ref[o_bp2])                        # (TB, 1)

    # ---------------- loss formula ----------------
    freq = freq_scale * jnp.exp(xs[:, 0:1])                       # (TB, 1)
    b_off = b_lim * x_ch[C - 1] + 5.0                             # (TB, T), last channel

    # The +5 offsets on h cancel inside roll(+1) - roll(-1) and h_lim factors
    # out of the sum, so h_with_offset is never materialized.  Each roll is a
    # single XLU lane rotation; a direction-convention flip only negates the
    # sum, which abs() absorbs.
    d = (pltpu.roll(h_raw, shift=1, axis=1)
         - pltpu.roll(h_raw, shift=T - 1, axis=1))                # (TB, T)
    shoe = h_lim * jnp.sum(b_off * d, axis=1, keepdims=True)      # (TB, 1)

    ploss = freq * (0.5 + 0.1 * pp) * jnp.abs(shoe)
    # NOTE: log(0) -> -inf if |shoelace| == 0, identical to the torch reference.
    logp_ref[...] = jnp.log(ploss)                                # (TB, 1)
    # (For B >= ~4k a lane-dense (1, B) logp slab would avoid masked stores;
    #  irrelevant at small B.)

    if transpose_h:
        h_ref[...] = jnp.transpose(h_raw, (1, 0))                 # (T, TB) lane-dense
    else:
        h_ref[...] = h_raw                                        # (TB, T)


def loss_predictor_forward(x_ts, x_scalars, params, b_lim, h_lim, freq_scale,
                           block_b=None, ts_transfer_dtype=None):
    """Pallas implementation of LossPredictor.forward.

    Returns (log_ploss[B,1], h_pred[T,B,1]) matching the torch output shapes.
    `ts_transfer_dtype=jnp.bfloat16` halves x_ts HBM traffic (useful on v5e);
    compute stays f32 in-kernel.
    """
    B, C, T = x_ts.shape
    S = x_scalars.shape[1]
    H1 = params["w1ts"].shape[1]
    P = params["wp1"].shape[1]

    # ---- batch-tile selection against a scoped-VMEM working-set budget ------
    # Rough per-row f32 bytes: double-buffered I/O (x_ts, x_scalars, h, logp)
    # plus live (TB, T) temporaries inside the kernel.
    row_bytes = 4 * (3 * C * T + 2 * S + 10 * T + 8)
    tb_max = max(8, min(512, ((24 << 20) // row_bytes) // 8 * 8))
    if block_b is not None:
        TB = max(8, _round_up(int(block_b), 8))
    else:
        rb8 = _round_up(B, 8)
        if rb8 <= min(tb_max, 256):
            TB = rb8                                   # tiny batch: one block
        else:
            # Multi-block: multiples of 128 keep the transposed h store
            # lane-dense; the ~B/2 cap keeps >= 2 grid steps so both v7x
            # TensorCores get work.
            tb128 = max(128, (tb_max // 128) * 128)
            half = max(128, _round_up(-(-B // 2), 128))
            TB = min(tb128, half)
    B_pad = _round_up(B, TB)            # pad ragged batches instead of TB = B
    nb = B_pad // TB
    transpose_h = (TB % 128 == 0) or (nb == 1)

    # Pack all tiny parameters into one flat f32 vector; scalar-prefetched into
    # SMEM once before the grid runs.
    flat_params = jnp.concatenate([
        params["w1ts"].reshape(-1), params["w1sc"].reshape(-1),
        params["b1"].reshape(-1), params["w2"].reshape(-1),
        params["b2"].reshape(-1),
        params["wp1"].reshape(-1), params["bp1"].reshape(-1),
        params["wp2"].reshape(-1), params["bp2"].reshape(-1),
    ]).astype(jnp.float32)

    dma_dtype = jnp.float32 if ts_transfer_dtype is None else ts_transfer_dtype
    x_ts_flat = x_ts.reshape(B, C * T).astype(dma_dtype)   # contiguous reshape: free
    x_sc = x_scalars.astype(jnp.float32)
    if B_pad != B:
        x_ts_flat = jnp.pad(x_ts_flat, ((0, B_pad - B), (0, 0)))
        x_sc = jnp.pad(x_sc, ((0, B_pad - B), (0, 0)))

    kern = functools.partial(loss_predictor_kernel, C=C, S=S, H1=H1, P=P, T=T,
                             b_lim=float(b_lim), h_lim=float(h_lim),
                             freq_scale=float(freq_scale),
                             transpose_h=transpose_h)

    if transpose_h:
        h_shape = (T, B_pad)
        h_spec = pl.BlockSpec((T, TB), lambda i, prm: (0, i))
    else:
        h_shape = (B_pad, T)
        h_spec = pl.BlockSpec((TB, T), lambda i, prm: (i, 0))

    # Explicit scoped-VMEM limit: v5e defaults to 16 MiB, v6e/v7x to 32 MiB;
    # stay well under v7x's 64 MiB physical.
    per_block = row_bytes * TB
    vmem_limit = int(min(48 << 20, max(24 << 20, per_block + (8 << 20))))

    logp_pad, h_pad = pl.pallas_call(
        kern,
        out_shape=(jax.ShapeDtypeStruct((B_pad, 1), jnp.float32),
                   jax.ShapeDtypeStruct(h_shape, jnp.float32)),
        grid_spec=pltpu.PrefetchScalarGridSpec(
            num_scalar_prefetch=1,                                   # flat_params
            grid=(nb,),
            in_specs=[
                pl.BlockSpec((TB, C * T), lambda i, prm: (i, 0)),    # x_ts (flat)
                pl.BlockSpec((TB, S), lambda i, prm: (i, 0)),        # x_scalars
            ],
            out_specs=(
                pl.BlockSpec((TB, 1), lambda i, prm: (i, 0)),        # log(ploss)
                h_spec,                                              # h
            ),
        ),
        compiler_params=pltpu.CompilerParams(
            dimension_semantics=("parallel",),                       # megacore-able
            vmem_limit_bytes=vmem_limit),
    )(flat_params, x_ts_flat, x_sc)

    logp = logp_pad[:B]
    if transpose_h:
        h_pred = h_pad[:, :B][:, :, None]                            # (T, B, 1)
    else:
        h_pred = jnp.transpose(h_pad, (1, 0))[:, :B][:, :, None]
    return logp, h_pred


def reference_forward(x_ts, x_scalars, params, b_lim, h_lim, freq_scale):
    """Pure-JAX reference mirroring the torch code line by line."""
    hid = (jnp.einsum('bct,ch->bth', x_ts, params["w1ts"])
           + jnp.einsum('bs,sh->bh', x_scalars, params["w1sc"])[:, None, :]
           + params["b1"])
    hid = jnp.tanh(hid)
    h_b1t = jnp.tanh(jnp.einsum('bth,h->bt', hid, params["w2"][0])
                     + params["b2"][0, 0])[:, None, :]                    # (B, 1, T)
    h_pred = jnp.transpose(h_b1t, (2, 0, 1))                              # (T, B, 1)

    freq = freq_scale * jnp.exp(x_scalars[:, 0:1])
    scaled_b = jnp.transpose(x_ts[:, -1:, :], (2, 0, 1))                  # (T, B, 1)
    b_off = b_lim * scaled_b + 5.0
    h_off = h_lim * h_pred + 5.0

    p1 = jnp.tanh(x_scalars @ params["wp1"] + params["bp1"])
    pp = jnp.tanh(p1 @ params["wp2"] + params["bp2"])                     # (B, 1)

    shoelace = jnp.sum(b_off * (jnp.roll(h_off, 1, axis=0)
                                - jnp.roll(h_off, -1, axis=0)), axis=0)   # (B, 1)
    ploss = freq * (0.5 + 0.1 * pp) * jnp.abs(shoelace)
    return jnp.log(ploss), h_pred


if __name__ == "__main__":
    # Small shapes consistent with the forward; T lane-dense (multiple of 128).
    B, C, T = 16, 4, 128      # batch, ts-channels, seq length
    S, H1 = 4, 8              # num_input_scalar, synthetic h_predictor hidden width
    b_lim, h_lim, freq_scale = 1.5, 2.0, 3.0

    key = jax.random.PRNGKey(0)
    ks = jax.random.split(key, 12)

    x_ts = jax.random.normal(ks[0], (B, C, T), jnp.float32)
    x_scalars = jax.random.normal(ks[1], (B, S), jnp.float32)

    params = {
        # synthetic h_predictor
        "w1ts": 0.5 * jax.random.normal(ks[2], (C, H1), jnp.float32),
        "w1sc": 0.5 * jax.random.normal(ks[3], (S, H1), jnp.float32),
        "b1":   0.1 * jax.random.normal(ks[4], (1, H1), jnp.float32),
        "w2":   0.5 * jax.random.normal(ks[5], (1, H1), jnp.float32),
        "b2":   0.1 * jax.random.normal(ks[6], (1, 1), jnp.float32),
        # post_processor: Linear(S, 8) -> Tanh -> Linear(8, 1) -> Tanh
        "wp1":  0.5 * jax.random.normal(ks[7], (S, 8), jnp.float32),
        "bp1":  0.1 * jax.random.normal(ks[8], (1, 8), jnp.float32),
        "wp2":  0.5 * jax.random.normal(ks[9], (8, 1), jnp.float32),
        "bp2":  0.1 * jax.random.normal(ks[10], (1, 1), jnp.float32),
    }

    logp, h_pred = loss_predictor_forward(x_ts, x_scalars, params,
                                          b_lim, h_lim, freq_scale)
    jax.block_until_ready((logp, h_pred))

    logp_ref, h_ref = reference_forward(x_ts, x_scalars, params,
                                        b_lim, h_lim, freq_scale)
    assert logp.shape == (B, 1) and h_pred.shape == (T, B, 1)
    assert jnp.allclose(h_pred, h_ref, rtol=1e-3, atol=1e-3), "h_pred mismatch"
    assert jnp.allclose(logp, logp_ref, rtol=1e-3, atol=1e-3), "log(ploss) mismatch"

    print("KERNEL_OK")
</pallas_src>

<mosaic_0001>
module attributes {stable_mosaic.version = 11 : i64} {
  func.func @loss_predictor_kernel(%arg0: i32, %arg1: memref<130xf32, #tpu.memory_space<smem>>, %arg2: memref<16x512xf32, #tpu.memory_space<vmem>>, %arg3: memref<16x4xf32, #tpu.memory_space<vmem>>, %arg4: memref<16x1xf32, #tpu.memory_space<vmem>>, %arg5: memref<128x16xf32, #tpu.memory_space<vmem>>) attributes {dimension_semantics = [#tpu.dimension_semantics<parallel>], iteration_bounds = array<i64: 1>, scalar_prefetch = 1 : i64, scratch_operands = 0 : i64, tpu.core_type = #tpu.core_type<tc>, window_params = [{transform_indices = @transform_0, window_bounds = array<i64: 16, 512>}, {transform_indices = @transform_1, window_bounds = array<i64: 16, 4>}, {transform_indices = @transform_2, window_bounds = array<i64: 16, 1>}, {transform_indices = @transform_3, window_bounds = array<i64: 128, 16>}]} {
    %c0 = arith.constant 0 : index
    %c0_0 = arith.constant 0 : index
    %0 = vector.load %arg3[%c0, %c0_0] : memref<16x4xf32, #tpu.memory_space<vmem>>, vector<16x4xf32>
    %c0_1 = arith.constant 0 : index
    %c0_2 = arith.constant 0 : index
    %1 = vector.load %arg2[%c0_1, %c0_2] : memref<16x512xf32, #tpu.memory_space<vmem>>, vector<16x128xf32>
    %c0_3 = arith.constant 0 : index
    %c128 = arith.constant 128 : index
    %2 = vector.load %arg2[%c0_3, %c128] : memref<16x512xf32, #tpu.memory_space<vmem>>, vector<16x128xf32>
    %c0_4 = arith.constant 0 : index
    %c256 = arith.constant 256 : index
    %3 = vector.load %arg2[%c0_4, %c256] : memref<16x512xf32, #tpu.memory_space<vmem>>, vector<16x128xf32>
    %c0_5 = arith.constant 0 : index
    %c384 = arith.constant 384 : index
    %4 = vector.load %arg2[%c0_5, %c384] : memref<16x512xf32, #tpu.memory_space<vmem>>, vector<16x128xf32>
    %c0_6 = arith.constant 0 : index
    %5 = memref.load %arg1[%c0_6] : memref<130xf32, #tpu.memory_space<smem>>
    %6 = vector.broadcast %5 : f32 to vector<16x128xf32>
    %7 = arith.mulf %1, %6 : vector<16x128xf32>
    %c8 = arith.constant 8 : index
    %8 = memref.load %arg1[%c8] : memref<130xf32, #tpu.memory_space<smem>>
    %9 = vector.broadcast %8 : f32 to vector<16x128xf32>
    %10 = arith.mulf %2, %9 : vector<16x128xf32>
    %11 = arith.addf %7, %10 : vector<16x128xf32>
    %c16 = arith.constant 16 : index
    %12 = memref.load %arg1[%c16] : memref<130xf32, #tpu.memory_space<smem>>
    %13 = vector.broadcast %12 : f32 to vector<16x128xf32>
    %14 = arith.mulf %3, %13 : vector<16x128xf32>
    %15 = arith.addf %11, %14 : vector<16x128xf32>
    %c24 = arith.constant 24 : index
    %16 = memref.load %arg1[%c24] : memref<130xf32, #tpu.memory_space<smem>>
    %17 = vector.broadcast %16 : f32 to vector<16x128xf32>
    %18 = arith.mulf %4, %17 : vector<16x128xf32>
    %19 = arith.addf %15, %18 : vector<16x128xf32>
    %20 = vector.extract_strided_slice %0 {offsets = [0, 0], sizes = [16, 1], strides = [1, 1]} : vector<16x4xf32> to vector<16x1xf32>
    %c32 = arith.constant 32 : index
    %21 = memref.load %arg1[%c32] : memref<130xf32, #tpu.memory_space<smem>>
    %22 = vector.broadcast %21 : f32 to vector<16x1xf32>
    %23 = arith.mulf %20, %22 : vector<16x1xf32>
    %24 = vector.extract_strided_slice %0 {offsets = [0, 1], sizes = [16, 1], strides = [1, 1]} : vector<16x4xf32> to vector<16x1xf32>
    %c40 = arith.constant 40 : index
    %25 = memref.load %arg1[%c40] : memref<130xf32, #tpu.memory_space<smem>>
    %26 = vector.broadcast %25 : f32 to vector<16x1xf32>
    %27 = arith.mulf %24, %26 : vector<16x1xf32>
    %28 = arith.addf %23, %27 : vector<16x1xf32>
    %29 = vector.extract_strided_slice %0 {offsets = [0, 2], sizes = [16, 1], strides = [1, 1]} : vector<16x4xf32> to vector<16x1xf32>
    %c48 = arith.constant 48 : index
    %30 = memref.load %arg1[%c48] : memref<130xf32, #tpu.memory_space<smem>>
    %31 = vector.broadcast %30 : f32 to vector<16x1xf32>
    %32 = arith.mulf %29, %31 : vector<16x1xf32>
    %33 = arith.addf %28, %32 : vector<16x1xf32>
    %34 = vector.extract_strided_slice %0 {offsets = [0, 3], sizes = [16, 1], strides = [1, 1]} : vector<16x4xf32> to vector<16x1xf32>
    %c56 = arith.constant 56 : index
    %35 = memref.load %arg1[%c56] : memref<130xf32, #tpu.memory_space<smem>>
    %36 = vector.broadcast %35 : f32 to vector<16x1xf32>
    %37 = arith.mulf %34, %36 : vector<16x1xf32>
    %38 = arith.addf %33, %37 : vector<16x1xf32>
    %c64 = arith.constant 64 : index
    %39 = memref.load %arg1[%c64] : memref<130xf32, #tpu.memory_space<smem>>
    %40 = vector.broadcast %39 : f32 to vector<16x1xf32>
    %41 = arith.addf %38, %40 : vector<16x1xf32>
    %42 = vector.broadcast %41 : vector<16x1xf32> to vector<16x128xf32>
    %43 = arith.addf %19, %42 : vector<16x128xf32>
    %44 = math.tanh %43 : vector<16x128xf32>
    %c72 = arith.constant 72 : index
    %45 = memref.load %arg1[%c72] : memref<130xf32, #tpu.memory_space<smem>>
    %46 = vector.broadcast %45 : f32 to vector<16x128xf32>
    %47 = arith.mulf %44, %46 : vector<16x128xf32>
    %c1 = arith.constant 1 : index
    %48 = memref.load %arg1[%c1] : memref<130xf32, #tpu.memory_space<smem>>
    %49 = vector.broadcast %48 : f32 to vector<16x128xf32>
    %50 = arith.mulf %1, %49 : vector<16x128xf32>
    %c9 = arith.constant 9 : index
    %51 = memref.load %arg1[%c9] : memref<130xf32, #tpu.memory_space<smem>>
    %52 = vector.broadcast %51 : f32 to vector<16x128xf32>
    %53 = arith.mulf %2, %52 : vector<16x128xf32>
    %54 = arith.addf %50, %53 : vector<16x128xf32>
    %c17 = arith.constant 17 : index
    %55 = memref.load %arg1[%c17] : memref<130xf32, #tpu.memory_space<smem>>
    %56 = vector.broadcast %55 : f32 to vector<16x128xf32>
    %57 = arith.mulf %3, %56 : vector<16x128xf32>
    %58 = arith.addf %54, %57 : vector<16x128xf32>
    %c25 = arith.constant 25 : index
    %59 = memref.load %arg1[%c25] : memref<130xf32, #tpu.memory_space<smem>>
    %60 = vector.broadcast %59 : f32 to vector<16x128xf32>
    %61 = arith.mulf %4, %60 : vector<16x128xf32>
    %62 = arith.addf %58, %61 : vector<16x128xf32>
    %63 = vector.extract_strided_slice %0 {offsets = [0, 0], sizes = [16, 1], strides = [1, 1]} : vector<16x4xf32> to vector<16x1xf32>
    %c33 = arith.constant 33 : index
    %64 = memref.load %arg1[%c33] : memref<130xf32, #tpu.memory_space<smem>>
    %65 = vector.broadcast %64 : f32 to vector<16x1xf32>
    %66 = arith.mulf %63, %65 : vector<16x1xf32>
    %67 = vector.extract_strided_slice %0 {offsets = [0, 1], sizes = [16, 1], strides = [1, 1]} : vector<16x4xf32> to vector<16x1xf32>
    %c41 = arith.constant 41 : index
    %68 = memref.load %arg1[%c41] : memref<130xf32, #tpu.memory_space<smem>>
    %69 = vector.broadcast %68 : f32 to vector<16x1xf32>
    %70 = arith.mulf %67, %69 : vector<16x1xf32>
    %71 = arith.addf %66, %70 : vector<16x1xf32>
    %72 = vector.extract_strided_slice %0 {offsets = [0, 2], sizes = [16, 1], strides = [1, 1]} : vector<16x4xf32> to vector<16x1xf32>
    %c49 = arith.constant 49 : index
    %73 = memref.load %arg1[%c49] : memref<130xf32, #tpu.memory_space<smem>>
    %74 = vector.broadcast %73 : f32 to vector<16x1xf32>
    %75 = arith.mulf %72, %74 : vector<16x1xf32>
    %76 = arith.addf %71, %75 : vector<16x1xf32>
    %77 = vector.extract_strided_slice %0 {offsets = [0, 3], sizes = [16, 1], strides = [1, 1]} : vector<16x4xf32> to vector<16x1xf32>
    %c57 = arith.constant 57 : index
    %78 = memref.load %arg1[%c57] : memref<130xf32, #tpu.memory_space<smem>>
    %79 = vector.broadcast %78 : f32 to vector<16x1xf32>
    %80 = arith.mulf %77, %79 : vector<16x1xf32>
    %81 = arith.addf %76, %80 : vector<16x1xf32>
    %c65 = arith.constant 65 : index
    %82 = memref.load %arg1[%c65] : memref<130xf32, #tpu.memory_space<smem>>
    %83 = vector.broadcast %82 : f32 to vector<16x1xf32>
    %84 = arith.addf %81, %83 : vector<16x1xf32>
    %85 = vector.broadcast %84 : vector<16x1xf32> to vector<16x128xf32>
    %86 = arith.addf %62, %85 : vector<16x128xf32>
    %87 = math.tanh %86 : vector<16x128xf32>
    %c73 = arith.constant 73 : index
    %88 = memref.load %arg1[%c73] : memref<130xf32, #tpu.memory_space<smem>>
    %89 = vector.broadcast %88 : f32 to vector<16x128xf32>
    %90 = arith.mulf %87, %89 : vector<16x128xf32>
    %91 = arith.addf %47, %90 : vector<16x128xf32>
    %c2 = arith.constant 2 : index
    %92 = memref.load %arg1[%c2] : memref<130xf32, #tpu.memory_space<smem>>
    %93 = vector.broadcast %92 : f32 to vector<16x128xf32>
    %94 = arith.mulf %1, %93 : vector<16x128xf32>
    %c10 = arith.constant 10 : index
    %95 = memref.load %arg1[%c10] : memref<130xf32, #tpu.memory_space<smem>>
    %96 = vector.broadcast %95 : f32 to vector<16x128xf32>
    %97 = arith.mulf %2, %96 : vector<16x128xf32>
    %98 = arith.addf %94, %97 : vector<16x128xf32>
    %c18 = arith.constant 18 : index
    %99 = memref.load %arg1[%c18] : memref<130xf32, #tpu.memory_space<smem>>
    %100 = vector.broadcast %99 : f32 to vector<16x128xf32>
    %101 = arith.mulf %3, %100 : vector<16x128xf32>
    %102 = arith.addf %98, %101 : vector<16x128xf32>
    %c26 = arith.constant 26 : index
    %103 = memref.load %arg1[%c26] : memref<130xf32, #tpu.memory_space<smem>>
    %104 = vector.broadcast %103 : f32 to vector<16x128xf32>
    %105 = arith.mulf %4, %104 : vector<16x128xf32>
    %106 = arith.addf %102, %105 : vector<16x128xf32>
    %107 = vector.extract_strided_slice %0 {offsets = [0, 0], sizes = [16, 1], strides = [1, 1]} : vector<16x4xf32> to vector<16x1xf32>
    %c34 = arith.constant 34 : index
    %108 = memref.load %arg1[%c34] : memref<130xf32, #tpu.memory_space<smem>>
    %109 = vector.broadcast %108 : f32 to vector<16x1xf32>
    %110 = arith.mulf %107, %109 : vector<16x1xf32>
    %111 = vector.extract_strided_slice %0 {offsets = [0, 1], sizes = [16, 1], strides = [1, 1]} : vector<16x4xf32> to vector<16x1xf32>
    %c42 = arith.constant 42 : index
    %112 = memref.load %arg1[%c42] : memref<130xf32, #tpu.memory_space<smem>>
    %113 = vector.broadcast %112 : f32 to vector<16x1xf32>
    %114 = arith.mulf %111, %113 : vector<16x1xf32>
    %115 = arith.addf %110, %114 : vector<16x1xf32>
    %116 = vector.extract_strided_slice %0 {offsets = [0, 2], sizes = [16, 1], strides = [1, 1]} : vector<16x4xf32> to vector<16x1xf32>
    %c50 = arith.constant 50 : index
    %117 = memref.load %arg1[%c50] : memref<130xf32, #tpu.memory_space<smem>>
    %118 = vector.broadcast %117 : f32 to vector<16x1xf32>
    %119 = arith.mulf %116, %118 : vector<16x1xf32>
    %120 = arith.addf %115, %119 : vector<16x1xf32>
    %121 = vector.extract_strided_slice %0 {offsets = [0, 3], sizes = [16, 1], strides = [1, 1]} : vector<16x4xf32> to vector<16x1xf32>
    %c58 = arith.constant 58 : index
    %122 = memref.load %arg1[%c58] : memref<130xf32, #tpu.memory_space<smem>>
    %123 = vector.broadcast %122 : f32 to vector<16x1xf32>
    %124 = arith.mulf %121, %123 : vector<16x1xf32>
    %125 = arith.addf %120, %124 : vector<16x1xf32>
    %c66 = arith.constant 66 : index
    %126 = memref.load %arg1[%c66] : memref<130xf32, #tpu.memory_space<smem>>
    %127 = vector.broadcast %126 : f32 to vector<16x1xf32>
    %128 = arith.addf %125, %127 : vector<16x1xf32>
    %129 = vector.broadcast %128 : vector<16x1xf32> to vector<16x128xf32>
    %130 = arith.addf %106, %129 : vector<16x128xf32>
    %131 = math.tanh %130 : vector<16x128xf32>
    %c74 = arith.constant 74 : index
    %132 = memref.load %arg1[%c74] : memref<130xf32, #tpu.memory_space<smem>>
    %133 = vector.broadcast %132 : f32 to vector<16x128xf32>
    %134 = arith.mulf %131, %133 : vector<16x128xf32>
    %135 = arith.addf %91, %134 : vector<16x128xf32>
    %c3 = arith.constant 3 : index
    %136 = memref.load %arg1[%c3] : memref<130xf32, #tpu.memory_space<smem>>
    %137 = vector.broadcast %136 : f32 to vector<16x128xf32>
    %138 = arith.mulf %1, %137 : vector<16x128xf32>
    %c11 = arith.constant 11 : index
    %139 = memref.load %arg1[%c11] : memref<130xf32, #tpu.memory_space<smem>>
    %140 = vector.broadcast %139 : f32 to vector<16x128xf32>
    %141 = arith.mulf %2, %140 : vector<16x128xf32>
    %142 = arith.addf %138, %141 : vector<16x128xf32>
    %c19 = arith.constant 19 : index
    %143 = memref.load %arg1[%c19] : memref<130xf32, #tpu.memory_space<smem>>
    %144 = vector.broadcast %143 : f32 to vector<16x128xf32>
    %145 = arith.mulf %3, %144 : vector<16x128xf32>
    %146 = arith.addf %142, %145 : vector<16x128xf32>
    %c27 = arith.constant 27 : index
    %147 = memref.load %arg1[%c27] : memref<130xf32, #tpu.memory_space<smem>>
    %148 = vector.broadcast %147 : f32 to vector<16x128xf32>
    %149 = arith.mulf %4, %148 : vector<16x128xf32>
    %150 = arith.addf %146, %149 : vector<16x128xf32>
    %151 = vector.extract_strided_slice %0 {offsets = [0, 0], sizes = [16, 1], strides = [1, 1]} : vector<16x4xf32> to vector<16x1xf32>
    %c35 = arith.constant 35 : index
    %152 = memref.load %arg1[%c35] : memref<130xf32, #tpu.memory_space<smem>>
    %153 = vector.broadcast %152 : f32 to vector<16x1xf32>
    %154 = arith.mulf %151, %153 : vector<16x1xf32>
    %155 = vector.extract_strided_slice %0 {offsets = [0, 1], sizes = [16, 1], strides = [1, 1]} : vector<16x4xf32> to vector<16x1xf32>
    %c43 = arith.constant 43 : index
    %156 = memref.load %arg1[%c43] : memref<130xf32, #tpu.memory_space<smem>>
    %157 = vector.broadcast %156 : f32 to vector<16x1xf32>
    %158 = arith.mulf %155, %157 : vector<16x1xf32>
    %159 = arith.addf %154, %158 : vector<16x1xf32>
    %160 = vector.extract_strided_slice %0 {offsets = [0, 2], sizes = [16, 1], strides = [1, 1]} : vector<16x4xf32> to vector<16x1xf32>
    %c51 = arith.constant 51 : index
    %161 = memref.load %arg1[%c51] : memref<130xf32, #tpu.memory_space<smem>>
    %162 = vector.broadcast %161 : f32 to vector<16x1xf32>
    %163 = arith.mulf %160, %162 : vector<16x1xf32>
    %164 = arith.addf %159, %163 : vector<16x1xf32>
    %165 = vector.extract_strided_slice %0 {offsets = [0, 3], sizes = [16, 1], strides = [1, 1]} : vector<16x4xf32> to vector<16x1xf32>
    %c59 = arith.constant 59 : index
    %166 = memref.load %arg1[%c59] : memref<130xf32, #tpu.memory_space<smem>>
    %167 = vector.broadcast %166 : f32 to vector<16x1xf32>
    %168 = arith.mulf %165, %167 : vector<16x1xf32>
    %169 = arith.addf %164, %168 : vector<16x1xf32>
    %c67 = arith.constant 67 : index
    %170 = memref.load %arg1[%c67] : memref<130xf32, #tpu.memory_space<smem>>
    %171 = vector.broadcast %170 : f32 to vector<16x1xf32>
    %172 = arith.addf %169, %171 : vector<16x1xf32>
    %173 = vector.broadcast %172 : vector<16x1xf32> to vector<16x128xf32>
    %174 = arith.addf %150, %173 : vector<16x128xf32>
    %175 = math.tanh %174 : vector<16x128xf32>
    %c75 = arith.constant 75 : index
    %176 = memref.load %arg1[%c75] : memref<130xf32, #tpu.memory_space<smem>>
    %177 = vector.broadcast %176 : f32 to vector<16x128xf32>
    %178 = arith.mulf %175, %177 : vector<16x128xf32>
    %179 = arith.addf %135, %178 : vector<16x128xf32>
    %c4 = arith.constant 4 : index
    %180 = memref.load %arg1[%c4] : memref<130xf32, #tpu.memory_space<smem>>
    %181 = vector.broadcast %180 : f32 to vector<16x128xf32>
    %182 = arith.mulf %1, %181 : vector<16x128xf32>
    %c12 = arith.constant 12 : index
    %183 = memref.load %arg1[%c12] : memref<130xf32, #tpu.memory_space<smem>>
    %184 = vector.broadcast %183 : f32 to vector<16x128xf32>
    %185 = arith.mulf %2, %184 : vector<16x128xf32>
    %186 = arith.addf %182, %185 : vector<16x128xf32>
    %c20 = arith.constant 20 : index
    %187 = memref.load %arg1[%c20] : memref<130xf32, #tpu.memory_space<smem>>
    %188 = vector.broadcast %187 : f32 to vector<16x128xf32>
    %189 = arith.mulf %3, %188 : vector<16x128xf32>
    %190 = arith.addf %186, %189 : vector<16x128xf32>
    %c28 = arith.constant 28 : index
    %191 = memref.load %arg1[%c28] : memref<130xf32, #tpu.memory_space<smem>>
    %192 = vector.broadcast %191 : f32 to vector<16x128xf32>
    %193 = arith.mulf %4, %192 : vector<16x128xf32>
    %194 = arith.addf %190, %193 : vector<16x128xf32>
    %195 = vector.extract_strided_slice %0 {offsets = [0, 0], sizes = [16, 1], strides = [1, 1]} : vector<16x4xf32> to vector<16x1xf32>
    %c36 = arith.constant 36 : index
    %196 = memref.load %arg1[%c36] : memref<130xf32, #tpu.memory_space<smem>>
    %197 = vector.broadcast %196 : f32 to vector<16x1xf32>
    %198 = arith.mulf %195, %197 : vector<16x1xf32>
    %199 = vector.extract_strided_slice %0 {offsets = [0, 1], sizes = [16, 1], strides = [1, 1]} : vector<16x4xf32> to vector<16x1xf32>
    %c44 = arith.constant 44 : index
    %200 = memref.load %arg1[%c44] : memref<130xf32, #tpu.memory_space<smem>>
    %201 = vector.broadcast %200 : f32 to vector<16x1xf32>
    %202 = arith.mulf %199, %201 : vector<16x1xf32>
    %203 = arith.addf %198, %202 : vector<16x1xf32>
    %204 = vector.extract_strided_slice %0 {offsets = [0, 2], sizes = [16, 1], strides = [1, 1]} : vector<16x4xf32> to vector<16x1xf32>
    %c52 = arith.constant 52 : index
    %205 = memref.load %arg1[%c52] : memref<130xf32, #tpu.memory_space<smem>>
    %206 = vector.broadcast %205 : f32 to vector<16x1xf32>
    %207 = arith.mulf %204, %206 : vector<16x1xf32>
    %208 = arith.addf %203, %207 : vector<16x1xf32>
    %209 = vector.extract_strided_slice %0 {offsets = [0, 3], sizes = [16, 1], strides = [1, 1]} : vector<16x4xf32> to vector<16x1xf32>
    %c60 = arith.constant 60 : index
    %210 = memref.load %arg1[%c60] : memref<130xf32, #tpu.memory_space<smem>>
    %211 = vector.broadcast %210 : f32 to vector<16x1xf32>
    %212 = arith.mulf %209, %211 : vector<16x1xf32>
    %213 = arith.addf %208, %212 : vector<16x1xf32>
    %c68 = arith.constant 68 : index
    %214 = memref.load %arg1[%c68] : memref<130xf32, #tpu.memory_space<smem>>
    %215 = vector.broadcast %214 : f32 to vector<16x1xf32>
    %216 = arith.addf %213, %215 : vector<16x1xf32>
    %217 = vector.broadcast %216 : vector<16x1xf32> to vector<16x128xf32>
    %218 = arith.addf %194, %217 : vector<16x128xf32>
    %219 = math.tanh %218 : vector<16x128xf32>
    %c76 = arith.constant 76 : index
    %220 = memref.load %arg1[%c76] : memref<130xf32, #tpu.memory_space<smem>>
    %221 = vector.broadcast %220 : f32 to vector<16x128xf32>
    %222 = arith.mulf %219, %221 : vector<16x128xf32>
    %223 = arith.addf %179, %222 : vector<16x128xf32>
    %c5 = arith.constant 5 : index
    %224 = memref.load %arg1[%c5] : memref<130xf32, #tpu.memory_space<smem>>
    %225 = vector.broadcast %224 : f32 to vector<16x128xf32>
    %226 = arith.mulf %1, %225 : vector<16x128xf32>
    %c13 = arith.constant 13 : index
    %227 = memref.load %arg1[%c13] : memref<130xf32, #tpu.memory_space<smem>>
    %228 = vector.broadcast %227 : f32 to vector<16x128xf32>
    %229 = arith.mulf %2, %228 : vector<16x128xf32>
    %230 = arith.addf %226, %229 : vector<16x128xf32>
    %c21 = arith.constant 21 : index
    %231 = memref.load %arg1[%c21] : memref<130xf32, #tpu.memory_space<smem>>
    %232 = vector.broadcast %231 : f32 to vector<16x128xf32>
    %233 = arith.mulf %3, %232 : vector<16x128xf32>
    %234 = arith.addf %230, %233 : vector<16x128xf32>
    %c29 = arith.constant 29 : index
    %235 = memref.load %arg1[%c29] : memref<130xf32, #tpu.memory_space<smem>>
    %236 = vector.broadcast %235 : f32 to vector<16x128xf32>
    %237 = arith.mulf %4, %236 : vector<16x128xf32>
    %238 = arith.addf %234, %237 : vector<16x128xf32>
    %239 = vector.extract_strided_slice %0 {offsets = [0, 0], sizes = [16, 1], strides = [1, 1]} : vector<16x4xf32> to vector<16x1xf32>
    %c37 = arith.constant 37 : index
    %240 = memref.load %arg1[%c37] : memref<130xf32, #tpu.memory_space<smem>>
    %241 = vector.broadcast %240 : f32 to vector<16x1xf32>
    %242 = arith.mulf %239, %241 : vector<16x1xf32>
    %243 = vector.extract_strided_slice %0 {offsets = [0, 1], sizes = [16, 1], strides = [1, 1]} : vector<16x4xf32> to vector<16x1xf32>
    %c45 = arith.constant 45 : index
    %244 = memref.load %arg1[%c45] : memref<130xf32, #tpu.memory_space<smem>>
    %245 = vector.broadcast %244 : f32 to vector<16x1xf32>
    %246 = arith.mulf %243, %245 : vector<16x1xf32>
    %247 = arith.addf %242, %246 : vector<16x1xf32>
    %248 = vector.extract_strided_slice %0 {offsets = [0, 2], sizes = [16, 1], strides = [1, 1]} : vector<16x4xf32> to vector<16x1xf32>
    %c53 = arith.constant 53 : index
    %249 = memref.load %arg1[%c53] : memref<130xf32, #tpu.memory_space<smem>>
    %250 = vector.broadcast %249 : f32 to vector<16x1xf32>
    %251 = arith.mulf %248, %250 : vector<16x1xf32>
    %252 = arith.addf %247, %251 : vector<16x1xf32>
    %253 = vector.extract_strided_slice %0 {offsets = [0, 3], sizes = [16, 1], strides = [1, 1]} : vector<16x4xf32> to vector<16x1xf32>
    %c61 = arith.constant 61 : index
    %254 = memref.load %arg1[%c61] : memref<130xf32, #tpu.memory_space<smem>>
    %255 = vector.broadcast %254 : f32 to vector<16x1xf32>
    %256 = arith.mulf %253, %255 : vector<16x1xf32>
    %257 = arith.addf %252, %256 : vector<16x1xf32>
    %c69 = arith.constant 69 : index
    %258 = memref.load %arg1[%c69] : memref<130xf32, #tpu.memory_space<smem>>
    %259 = vector.broadcast %258 : f32 to vector<16x1xf32>
    %260 = arith.addf %257, %259 : vector<16x1xf32>
    %261 = vector.broadcast %260 : vector<16x1xf32> to vector<16x128xf32>
    %262 = arith.addf %238, %261 : vector<16x128xf32>
    %263 = math.tanh %262 : vector<16x128xf32>
    %c77 = arith.constant 77 : index
    %264 = memref.load %arg1[%c77] : memref<130xf32, #tpu.memory_space<smem>>
    %265 = vector.broadcast %264 : f32 to vector<16x128xf32>
    %266 = arith.mulf %263, %265 : vector<16x128xf32>
    %267 = arith.addf %223, %266 : vector<16x128xf32>
    %c6 = arith.constant 6 : index
    %268 = memref.load %arg1[%c6] : memref<130xf32, #tpu.memory_space<smem>>
    %269 = vector.broadcast %268 : f32 to vector<16x128xf32>
    %270 = arith.mulf %1, %269 : vector<16x128xf32>
    %c14 = arith.constant 14 : index
    %271 = memref.load %arg1[%c14] : memref<130xf32, #tpu.memory_space<smem>>
    %272 = vector.broadcast %271 : f32 to vector<16x128xf32>
    %273 = arith.mulf %2, %272 : vector<16x128xf32>
    %274 = arith.addf %270, %273 : vector<16x128xf32>
    %c22 = arith.constant 22 : index
    %275 = memref.load %arg1[%c22] : memref<130xf32, #tpu.memory_space<smem>>
    %276 = vector.broadcast %275 : f32 to vector<16x128xf32>
    %277 = arith.mulf %3, %276 : vector<16x128xf32>
    %278 = arith.addf %274, %277 : vector<16x128xf32>
    %c30 = arith.constant 30 : index
    %279 = memref.load %arg1[%c30] : memref<130xf32, #tpu.memory_space<smem>>
    %280 = vector.broadcast %279 : f32 to vector<16x128xf32>
    %281 = arith.mulf %4, %280 : vector<16x128xf32>
    %282 = arith.addf %278, %281 : vector<16x128xf32>
    %283 = vector.extract_strided_slice %0 {offsets = [0, 0], sizes = [16, 1], strides = [1, 1]} : vector<16x4xf32> to vector<16x1xf32>
    %c38 = arith.constant 38 : index
    %284 = memref.load %arg1[%c38] : memref<130xf32, #tpu.memory_space<smem>>
    %285 = vector.broadcast %284 : f32 to vector<16x1xf32>
    %286 = arith.mulf %283, %285 : vector<16x1xf32>
    %287 = vector.extract_strided_slice %0 {offsets = [0, 1], sizes = [16, 1], strides = [1, 1]} : vector<16x4xf32> to vector<16x1xf32>
    %c46 = arith.constant 46 : index
    %288 = memref.load %arg1[%c46] : memref<130xf32, #tpu.memory_space<smem>>
    %289 = vector.broadcast %288 : f32 to vector<16x1xf32>
    %290 = arith.mulf %287, %289 : vector<16x1xf32>
    %291 = arith.addf %286, %290 : vector<16x1xf32>
    %292 = vector.extract_strided_slice %0 {offsets = [0, 2], sizes = [16, 1], strides = [1, 1]} : vector<16x4xf32> to vector<16x1xf32>
    %c54 = arith.constant 54 : index
    %293 = memref.load %arg1[%c54] : memref<130xf32, #tpu.memory_space<smem>>
    %294 = vector.broadcast %293 : f32 to vector<16x1xf32>
    %295 = arith.mulf %292, %294 : vector<16x1xf32>
    %296 = arith.addf %291, %295 : vector<16x1xf32>
    %297 = vector.extract_strided_slice %0 {offsets = [0, 3], sizes = [16, 1], strides = [1, 1]} : vector<16x4xf32> to vector<16x1xf32>
    %c62 = arith.constant 62 : index
    %298 = memref.load %arg1[%c62] : memref<130xf32, #tpu.memory_space<smem>>
    %299 = vector.broadcast %298 : f32 to vector<16x1xf32>
    %300 = arith.mulf %297, %299 : vector<16x1xf32>
    %301 = arith.addf %296, %300 : vector<16x1xf32>
    %c70 = arith.constant 70 : index
    %302 = memref.load %arg1[%c70] : memref<130xf32, #tpu.memory_space<smem>>
    %303 = vector.broadcast %302 : f32 to vector<16x1xf32>
    %304 = arith.addf %301, %303 : vector<16x1xf32>
    %305 = vector.broadcast %304 : vector<16x1xf32> to vector<16x128xf32>
    %306 = arith.addf %282, %305 : vector<16x128xf32>
    %307 = math.tanh %306 : vector<16x128xf32>
    %c78 = arith.constant 78 : index
    %308 = memref.load %arg1[%c78] : memref<130xf32, #tpu.memory_space<smem>>
    %309 = vector.broadcast %308 : f32 to vector<16x128xf32>
    %310 = arith.mulf %307, %309 : vector<16x128xf32>
    %311 = arith.addf %267, %310 : vector<16x128xf32>
    %c7 = arith.constant 7 : index
    %312 = memref.load %arg1[%c7] : memref<130xf32, #tpu.memory_space<smem>>
    %313 = vector.broadcast %312 : f32 to vector<16x128xf32>
    %314 = arith.mulf %1, %313 : vector<16x128xf32>
    %c15 = arith.constant 15 : index
    %315 = memref.load %arg1[%c15] : memref<130xf32, #tpu.memory_space<smem>>
    %316 = vector.broadcast %315 : f32 to vector<16x128xf32>
    %317 = arith.mulf %2, %316 : vector<16x128xf32>
    %318 = arith.addf %314, %317 : vector<16x128xf32>
    %c23 = arith.constant 23 : index
    %319 = memref.load %arg1[%c23] : memref<130xf32, #tpu.memory_space<smem>>
    %320 = vector.broadcast %319 : f32 to vector<16x128xf32>
    %321 = arith.mulf %3, %320 : vector<16x128xf32>
    %322 = arith.addf %318, %321 : vector<16x128xf32>
    %c31 = arith.constant 31 : index
    %323 = memref.load %arg1[%c31] : memref<130xf32, #tpu.memory_space<smem>>
    %324 = vector.broadcast %323 : f32 to vector<16x128xf32>
    %325 = arith.mulf %4, %324 : vector<16x128xf32>
    %326 = arith.addf %322, %325 : vector<16x128xf32>
    %327 = vector.extract_strided_slice %0 {offsets = [0, 0], sizes = [16, 1], strides = [1, 1]} : vector<16x4xf32> to vector<16x1xf32>
    %c39 = arith.constant 39 : index
    %328 = memref.load %arg1[%c39] : memref<130xf32, #tpu.memory_space<smem>>
    %329 = vector.broadcast %328 : f32 to vector<16x1xf32>
    %330 = arith.mulf %327, %329 : vector<16x1xf32>
    %331 = vector.extract_strided_slice %0 {offsets = [0, 1], sizes = [16, 1], strides = [1, 1]} : vector<16x4xf32> to vector<16x1xf32>
    %c47 = arith.constant 47 : index
    %332 = memref.load %arg1[%c47] : memref<130xf32, #tpu.memory_space<smem>>
    %333 = vector.broadcast %332 : f32 to vector<16x1xf32>
    %334 = arith.mulf %331, %333 : vector<16x1xf32>
    %335 = arith.addf %330, %334 : vector<16x1xf32>
    %336 = vector.extract_strided_slice %0 {offsets = [0, 2], sizes = [16, 1], strides = [1, 1]} : vector<16x4xf32> to vector<16x1xf32>
    %c55 = arith.constant 55 : index
    %337 = memref.load %arg1[%c55] : memref<130xf32, #tpu.memory_space<smem>>
    %338 = vector.broadcast %337 : f32 to vector<16x1xf32>
    %339 = arith.mulf %336, %338 : vector<16x1xf32>
    %340 = arith.addf %335, %339 : vector<16x1xf32>
    %341 = vector.extract_strided_slice %0 {offsets = [0, 3], sizes = [16, 1], strides = [1, 1]} : vector<16x4xf32> to vector<16x1xf32>
    %c63 = arith.constant 63 : index
    %342 = memref.load %arg1[%c63] : memref<130xf32, #tpu.memory_space<smem>>
    %343 = vector.broadcast %342 : f32 to vector<16x1xf32>
    %344 = arith.mulf %341, %343 : vector<16x1xf32>
    %345 = arith.addf %340, %344 : vector<16x1xf32>
    %c71 = arith.constant 71 : index
    %346 = memref.load %arg1[%c71] : memref<130xf32, #tpu.memory_space<smem>>
    %347 = vector.broadcast %346 : f32 to vector<16x1xf32>
    %348 = arith.addf %345, %347 : vector<16x1xf32>
    %349 = vector.broadcast %348 : vector<16x1xf32> to vector<16x128xf32>
    %350 = arith.addf %326, %349 : vector<16x128xf32>
    %351 = math.tanh %350 : vector<16x128xf32>
    %c79 = arith.constant 79 : index
    %352 = memref.load %arg1[%c79] : memref<130xf32, #tpu.memory_space<smem>>
    %353 = vector.broadcast %352 : f32 to vector<16x128xf32>
    %354 = arith.mulf %351, %353 : vector<16x128xf32>
    %355 = arith.addf %311, %354 : vector<16x128xf32>
    %c80 = arith.constant 80 : index
    %356 = memref.load %arg1[%c80] : memref<130xf32, #tpu.memory_space<smem>>
    %357 = vector.broadcast %356 : f32 to vector<16x128xf32>
    %358 = arith.addf %355, %357 : vector<16x128xf32>
    %359 = math.tanh %358 : vector<16x128xf32>
    %360 = vector.extract_strided_slice %0 {offsets = [0, 0], sizes = [16, 1], strides = [1, 1]} : vector<16x4xf32> to vector<16x1xf32>
    %c81 = arith.constant 81 : index
    %361 = memref.load %arg1[%c81] : memref<130xf32, #tpu.memory_space<smem>>
    %362 = vector.broadcast %361 : f32 to vector<16x1xf32>
    %363 = arith.mulf %360, %362 : vector<16x1xf32>
    %364 = vector.extract_strided_slice %0 {offsets = [0, 1], sizes = [16, 1], strides = [1, 1]} : vector<16x4xf32> to vector<16x1xf32>
    %c89 = arith.constant 89 : index
    %365 = memref.load %arg1[%c89] : memref<130xf32, #tpu.memory_space<smem>>
    %366 = vector.broadcast %365 : f32 to vector<16x1xf32>
    %367 = arith.mulf %364, %366 : vector<16x1xf32>
    %368 = arith.addf %363, %367 : vector<16x1xf32>
    %369 = vector.extract_strided_slice %0 {offsets = [0, 2], sizes = [16, 1], strides = [1, 1]} : vector<16x4xf32> to vector<16x1xf32>
    %c97 = arith.constant 97 : index
    %370 = memref.load %arg1[%c97] : memref<130xf32, #tpu.memory_space<smem>>
    %371 = vector.broadcast %370 : f32 to vector<16x1xf32>
    %372 = arith.mulf %369, %371 : vector<16x1xf32>
    %373 = arith.addf %368, %372 : vector<16x1xf32>
    %374 = vector.extract_strided_slice %0 {offsets = [0, 3], sizes = [16, 1], strides = [1, 1]} : vector<16x4xf32> to vector<16x1xf32>
    %c105 = arith.constant 105 : index
    %375 = memref.load %arg1[%c105] : memref<130xf32, #tpu.memory_space<smem>>
    %376 = vector.broadcast %375 : f32 to vector<16x1xf32>
    %377 = arith.mulf %374, %376 : vector<16x1xf32>
    %378 = arith.addf %373, %377 : vector<16x1xf32>
    %c113 = arith.constant 113 : index
    %379 = memref.load %arg1[%c113] : memref<130xf32, #tpu.memory_space<smem>>
    %380 = vector.broadcast %379 : f32 to vector<16x1xf32>
    %381 = arith.addf %378, %380 : vector<16x1xf32>
    %382 = math.tanh %381 : vector<16x1xf32>
    %c121 = arith.constant 121 : index
    %383 = memref.load %arg1[%c121] : memref<130xf32, #tpu.memory_space<smem>>
    %384 = vector.broadcast %383 : f32 to vector<16x1xf32>
    %385 = arith.mulf %382, %384 : vector<16x1xf32>
    %386 = vector.extract_strided_slice %0 {offsets = [0, 0], sizes = [16, 1], strides = [1, 1]} : vector<16x4xf32> to vector<16x1xf32>
    %c82 = arith.constant 82 : index
    %387 = memref.load %arg1[%c82] : memref<130xf32, #tpu.memory_space<smem>>
    %388 = vector.broadcast %387 : f32 to vector<16x1xf32>
    %389 = arith.mulf %386, %388 : vector<16x1xf32>
    %390 = vector.extract_strided_slice %0 {offsets = [0, 1], sizes = [16, 1], strides = [1, 1]} : vector<16x4xf32> to vector<16x1xf32>
    %c90 = arith.constant 90 : index
    %391 = memref.load %arg1[%c90] : memref<130xf32, #tpu.memory_space<smem>>
    %392 = vector.broadcast %391 : f32 to vector<16x1xf32>
    %393 = arith.mulf %390, %392 : vector<16x1xf32>
    %394 = arith.addf %389, %393 : vector<16x1xf32>
    %395 = vector.extract_strided_slice %0 {offsets = [0, 2], sizes = [16, 1], strides = [1, 1]} : vector<16x4xf32> to vector<16x1xf32>
    %c98 = arith.constant 98 : index
    %396 = memref.load %arg1[%c98] : memref<130xf32, #tpu.memory_space<smem>>
    %397 = vector.broadcast %396 : f32 to vector<16x1xf32>
    %398 = arith.mulf %395, %397 : vector<16x1xf32>
    %399 = arith.addf %394, %398 : vector<16x1xf32>
    %400 = vector.extract_strided_slice %0 {offsets = [0, 3], sizes = [16, 1], strides = [1, 1]} : vector<16x4xf32> to vector<16x1xf32>
    %c106 = arith.constant 106 : index
    %401 = memref.load %arg1[%c106] : memref<130xf32, #tpu.memory_space<smem>>
    %402 = vector.broadcast %401 : f32 to vector<16x1xf32>
    %403 = arith.mulf %400, %402 : vector<16x1xf32>
    %404 = arith.addf %399, %403 : vector<16x1xf32>
    %c114 = arith.constant 114 : index
    %405 = memref.load %arg1[%c114] : memref<130xf32, #tpu.memory_space<smem>>
    %406 = vector.broadcast %405 : f32 to vector<16x1xf32>
    %407 = arith.addf %404, %406 : vector<16x1xf32>
    %408 = math.tanh %407 : vector<16x1xf32>
    %c122 = arith.constant 122 : index
    %409 = memref.load %arg1[%c122] : memref<130xf32, #tpu.memory_space<smem>>
    %410 = vector.broadcast %409 : f32 to vector<16x1xf32>
    %411 = arith.mulf %408, %410 : vector<16x1xf32>
    %412 = arith.addf %385, %411 : vector<16x1xf32>
    %413 = vector.extract_strided_slice %0 {offsets = [0, 0], sizes = [16, 1], strides = [1, 1]} : vector<16x4xf32> to vector<16x1xf32>
    %c83 = arith.constant 83 : index
    %414 = memref.load %arg1[%c83] : memref<130xf32, #tpu.memory_space<smem>>
    %415 = vector.broadcast %414 : f32 to vector<16x1xf32>
    %416 = arith.mulf %413, %415 : vector<16x1xf32>
    %417 = vector.extract_strided_slice %0 {offsets = [0, 1], sizes = [16, 1], strides = [1, 1]} : vector<16x4xf32> to vector<16x1xf32>
    %c91 = arith.constant 91 : index
    %418 = memref.load %arg1[%c91] : memref<130xf32, #tpu.memory_space<smem>>
    %419 = vector.broadcast %418 : f32 to vector<16x1xf32>
    %420 = arith.mulf %417, %419 : vector<16x1xf32>
    %421 = arith.addf %416, %420 : vector<16x1xf32>
    %422 = vector.extract_strided_slice %0 {offsets = [0, 2], sizes = [16, 1], strides = [1, 1]} : vector<16x4xf32> to vector<16x1xf32>
    %c99 = arith.constant 99 : index
    %423 = memref.load %arg1[%c99] : memref<130xf32, #tpu.memory_space<smem>>
    %424 = vector.broadcast %423 : f32 to vector<16x1xf32>
    %425 = arith.mulf %422, %424 : vector<16x1xf32>
    %426 = arith.addf %421, %425 : vector<16x1xf32>
    %427 = vector.extract_strided_slice %0 {offsets = [0, 3], sizes = [16, 1], strides = [1, 1]} : vector<16x4xf32> to vector<16x1xf32>
    %c107 = arith.constant 107 : index
    %428 = memref.load %arg1[%c107] : memref<130xf32, #tpu.memory_space<smem>>
    %429 = vector.broadcast %428 : f32 to vector<16x1xf32>
    %430 = arith.mulf %427, %429 : vector<16x1xf32>
    %431 = arith.addf %426, %430 : vector<16x1xf32>
    %c115 = arith.constant 115 : index
    %432 = memref.load %arg1[%c115] : memref<130xf32, #tpu.memory_space<smem>>
    %433 = vector.broadcast %432 : f32 to vector<16x1xf32>
    %434 = arith.addf %431, %433 : vector<16x1xf32>
    %435 = math.tanh %434 : vector<16x1xf32>
    %c123 = arith.constant 123 : index
    %436 = memref.load %arg1[%c123] : memref<130xf32, #tpu.memory_space<smem>>
    %437 = vector.broadcast %436 : f32 to vector<16x1xf32>
    %438 = arith.mulf %435, %437 : vector<16x1xf32>
    %439 = arith.addf %412, %438 : vector<16x1xf32>
    %440 = vector.extract_strided_slice %0 {offsets = [0, 0], sizes = [16, 1], strides = [1, 1]} : vector<16x4xf32> to vector<16x1xf32>
    %c84 = arith.constant 84 : index
    %441 = memref.load %arg1[%c84] : memref<130xf32, #tpu.memory_space<smem>>
    %442 = vector.broadcast %441 : f32 to vector<16x1xf32>
    %443 = arith.mulf %440, %442 : vector<16x1xf32>
    %444 = vector.extract_strided_slice %0 {offsets = [0, 1], sizes = [16, 1], strides = [1, 1]} : vector<16x4xf32> to vector<16x1xf32>
    %c92 = arith.constant 92 : index
    %445 = memref.load %arg1[%c92] : memref<130xf32, #tpu.memory_space<smem>>
    %446 = vector.broadcast %445 : f32 to vector<16x1xf32>
    %447 = arith.mulf %444, %446 : vector<16x1xf32>
    %448 = arith.addf %443, %447 : vector<16x1xf32>
    %449 = vector.extract_strided_slice %0 {offsets = [0, 2], sizes = [16, 1], strides = [1, 1]} : vector<16x4xf32> to vector<16x1xf32>
    %c100 = arith.constant 100 : index
    %450 = memref.load %arg1[%c100] : memref<130xf32, #tpu.memory_space<smem>>
    %451 = vector.broadcast %450 : f32 to vector<16x1xf32>
    %452 = arith.mulf %449, %451 : vector<16x1xf32>
    %453 = arith.addf %448, %452 : vector<16x1xf32>
    %454 = vector.extract_strided_slice %0 {offsets = [0, 3], sizes = [16, 1], strides = [1, 1]} : vector<16x4xf32> to vector<16x1xf32>
    %c108 = arith.constant 108 : index
    %455 = memref.load %arg1[%c108] : memref<130xf32, #tpu.memory_space<smem>>
    %456 = vector.broadcast %455 : f32 to vector<16x1xf32>
    %457 = arith.mulf %454, %456 : vector<16x1xf32>
    %458 = arith.addf %453, %457 : vector<16x1xf32>
    %c116 = arith.constant 116 : index
    %459 = memref.load %arg1[%c116] : memref<130xf32, #tpu.memory_space<smem>>
    %460 = vector.broadcast %459 : f32 to vector<16x1xf32>
    %461 = arith.addf %458, %460 : vector<16x1xf32>
    %462 = math.tanh %461 : vector<16x1xf32>
    %c124 = arith.constant 124 : index
    %463 = memref.load %arg1[%c124] : memref<130xf32, #tpu.memory_space<smem>>
    %464 = vector.broadcast %463 : f32 to vector<16x1xf32>
    %465 = arith.mulf %462, %464 : vector<16x1xf32>
    %466 = arith.addf %439, %465 : vector<16x1xf32>
    %467 = vector.extract_strided_slice %0 {offsets = [0, 0], sizes = [16, 1], strides = [1, 1]} : vector<16x4xf32> to vector<16x1xf32>
    %c85 = arith.constant 85 : index
    %468 = memref.load %arg1[%c85] : memref<130xf32, #tpu.memory_space<smem>>
    %469 = vector.broadcast %468 : f32 to vector<16x1xf32>
    %470 = arith.mulf %467, %469 : vector<16x1xf32>
    %471 = vector.extract_strided_slice %0 {offsets = [0, 1], sizes = [16, 1], strides = [1, 1]} : vector<16x4xf32> to vector<16x1xf32>
    %c93 = arith.constant 93 : index
    %472 = memref.load %arg1[%c93] : memref<130xf32, #tpu.memory_space<smem>>
    %473 = vector.broadcast %472 : f32 to vector<16x1xf32>
    %474 = arith.mulf %471, %473 : vector<16x1xf32>
    %475 = arith.addf %470, %474 : vector<16x1xf32>
    %476 = vector.extract_strided_slice %0 {offsets = [0, 2], sizes = [16, 1], strides = [1, 1]} : vector<16x4xf32> to vector<16x1xf32>
    %c101 = arith.constant 101 : index
    %477 = memref.load %arg1[%c101] : memref<130xf32, #tpu.memory_space<smem>>
    %478 = vector.broadcast %477 : f32 to vector<16x1xf32>
    %479 = arith.mulf %476, %478 : vector<16x1xf32>
    %480 = arith.addf %475, %479 : vector<16x1xf32>
    %481 = vector.extract_strided_slice %0 {offsets = [0, 3], sizes = [16, 1], strides = [1, 1]} : vector<16x4xf32> to vector<16x1xf32>
    %c109 = arith.constant 109 : index
    %482 = memref.load %arg1[%c109] : memref<130xf32, #tpu.memory_space<smem>>
    %483 = vector.broadcast %482 : f32 to vector<16x1xf32>
    %484 = arith.mulf %481, %483 : vector<16x1xf32>
    %485 = arith.addf %480, %484 : vector<16x1xf32>
    %c117 = arith.constant 117 : index
    %486 = memref.load %arg1[%c117] : memref<130xf32, #tpu.memory_space<smem>>
    %487 = vector.broadcast %486 : f32 to vector<16x1xf32>
    %488 = arith.addf %485, %487 : vector<16x1xf32>
    %489 = math.tanh %488 : vector<16x1xf32>
    %c125 = arith.constant 125 : index
    %490 = memref.load %arg1[%c125] : memref<130xf32, #tpu.memory_space<smem>>
    %491 = vector.broadcast %490 : f32 to vector<16x1xf32>
    %492 = arith.mulf %489, %491 : vector<16x1xf32>
    %493 = arith.addf %466, %492 : vector<16x1xf32>
    %494 = vector.extract_strided_slice %0 {offsets = [0, 0], sizes = [16, 1], strides = [1, 1]} : vector<16x4xf32> to vector<16x1xf32>
    %c86 = arith.constant 86 : index
    %495 = memref.load %arg1[%c86] : memref<130xf32, #tpu.memory_space<smem>>
    %496 = vector.broadcast %495 : f32 to vector<16x1xf32>
    %497 = arith.mulf %494, %496 : vector<16x1xf32>
    %498 = vector.extract_strided_slice %0 {offsets = [0, 1], sizes = [16, 1], strides = [1, 1]} : vector<16x4xf32> to vector<16x1xf32>
    %c94 = arith.constant 94 : index
    %499 = memref.load %arg1[%c94] : memref<130xf32, #tpu.memory_space<smem>>
    %500 = vector.broadcast %499 : f32 to vector<16x1xf32>
    %501 = arith.mulf %498, %500 : vector<16x1xf32>
    %502 = arith.addf %497, %501 : vector<16x1xf32>
    %503 = vector.extract_strided_slice %0 {offsets = [0, 2], sizes = [16, 1], strides = [1, 1]} : vector<16x4xf32> to vector<16x1xf32>
    %c102 = arith.constant 102 : index
    %504 = memref.load %arg1[%c102] : memref<130xf32, #tpu.memory_space<smem>>
    %505 = vector.broadcast %504 : f32 to vector<16x1xf32>
    %506 = arith.mulf %503, %505 : vector<16x1xf32>
    %507 = arith.addf %502, %506 : vector<16x1xf32>
    %508 = vector.extract_strided_slice %0 {offsets = [0, 3], sizes = [16, 1], strides = [1, 1]} : vector<16x4xf32> to vector<16x1xf32>
    %c110 = arith.constant 110 : index
    %509 = memref.load %arg1[%c110] : memref<130xf32, #tpu.memory_space<smem>>
    %510 = vector.broadcast %509 : f32 to vector<16x1xf32>
    %511 = arith.mulf %508, %510 : vector<16x1xf32>
    %512 = arith.addf %507, %511 : vector<16x1xf32>
    %c118 = arith.constant 118 : index
    %513 = memref.load %arg1[%c118] : memref<130xf32, #tpu.memory_space<smem>>
    %514 = vector.broadcast %513 : f32 to vector<16x1xf32>
    %515 = arith.addf %512, %514 : vector<16x1xf32>
    %516 = math.tanh %515 : vector<16x1xf32>
    %c126 = arith.constant 126 : index
    %517 = memref.load %arg1[%c126] : memref<130xf32, #tpu.memory_space<smem>>
    %518 = vector.broadcast %517 : f32 to vector<16x1xf32>
    %519 = arith.mulf %516, %518 : vector<16x1xf32>
    %520 = arith.addf %493, %519 : vector<16x1xf32>
    %521 = vector.extract_strided_slice %0 {offsets = [0, 0], sizes = [16, 1], strides = [1, 1]} : vector<16x4xf32> to vector<16x1xf32>
    %c87 = arith.constant 87 : index
    %522 = memref.load %arg1[%c87] : memref<130xf32, #tpu.memory_space<smem>>
    %523 = vector.broadcast %522 : f32 to vector<16x1xf32>
    %524 = arith.mulf %521, %523 : vector<16x1xf32>
    %525 = vector.extract_strided_slice %0 {offsets = [0, 1], sizes = [16, 1], strides = [1, 1]} : vector<16x4xf32> to vector<16x1xf32>
    %c95 = arith.constant 95 : index
    %526 = memref.load %arg1[%c95] : memref<130xf32, #tpu.memory_space<smem>>
    %527 = vector.broadcast %526 : f32 to vector<16x1xf32>
    %528 = arith.mulf %525, %527 : vector<16x1xf32>
    %529 = arith.addf %524, %528 : vector<16x1xf32>
    %530 = vector.extract_strided_slice %0 {offsets = [0, 2], sizes = [16, 1], strides = [1, 1]} : vector<16x4xf32> to vector<16x1xf32>
    %c103 = arith.constant 103 : index
    %531 = memref.load %arg1[%c103] : memref<130xf32, #tpu.memory_space<smem>>
    %532 = vector.broadcast %531 : f32 to vector<16x1xf32>
    %533 = arith.mulf %530, %532 : vector<16x1xf32>
    %534 = arith.addf %529, %533 : vector<16x1xf32>
    %535 = vector.extract_strided_slice %0 {offsets = [0, 3], sizes = [16, 1], strides = [1, 1]} : vector<16x4xf32> to vector<16x1xf32>
    %c111 = arith.constant 111 : index
    %536 = memref.load %arg1[%c111] : memref<130xf32, #tpu.memory_space<smem>>
    %537 = vector.broadcast %536 : f32 to vector<16x1xf32>
    %538 = arith.mulf %535, %537 : vector<16x1xf32>
    %539 = arith.addf %534, %538 : vector<16x1xf32>
    %c119 = arith.constant 119 : index
    %540 = memref.load %arg1[%c119] : memref<130xf32, #tpu.memory_space<smem>>
    %541 = vector.broadcast %540 : f32 to vector<16x1xf32>
    %542 = arith.addf %539, %541 : vector<16x1xf32>
    %543 = math.tanh %542 : vector<16x1xf32>
    %c127 = arith.constant 127 : index
    %544 = memref.load %arg1[%c127] : memref<130xf32, #tpu.memory_space<smem>>
    %545 = vector.broadcast %544 : f32 to vector<16x1xf32>
    %546 = arith.mulf %543, %545 : vector<16x1xf32>
    %547 = arith.addf %520, %546 : vector<16x1xf32>
    %548 = vector.extract_strided_slice %0 {offsets = [0, 0], sizes = [16, 1], strides = [1, 1]} : vector<16x4xf32> to vector<16x1xf32>
    %c88 = arith.constant 88 : index
    %549 = memref.load %arg1[%c88] : memref<130xf32, #tpu.memory_space<smem>>
    %550 = vector.broadcast %549 : f32 to vector<16x1xf32>
    %551 = arith.mulf %548, %550 : vector<16x1xf32>
    %552 = vector.extract_strided_slice %0 {offsets = [0, 1], sizes = [16, 1], strides = [1, 1]} : vector<16x4xf32> to vector<16x1xf32>
    %c96 = arith.constant 96 : index
    %553 = memref.load %arg1[%c96] : memref<130xf32, #tpu.memory_space<smem>>
    %554 = vector.broadcast %553 : f32 to vector<16x1xf32>
    %555 = arith.mulf %552, %554 : vector<16x1xf32>
    %556 = arith.addf %551, %555 : vector<16x1xf32>
    %557 = vector.extract_strided_slice %0 {offsets = [0, 2], sizes = [16, 1], strides = [1, 1]} : vector<16x4xf32> to vector<16x1xf32>
    %c104 = arith.constant 104 : index
    %558 = memref.load %arg1[%c104] : memref<130xf32, #tpu.memory_space<smem>>
    %559 = vector.broadcast %558 : f32 to vector<16x1xf32>
    %560 = arith.mulf %557, %559 : vector<16x1xf32>
    %561 = arith.addf %556, %560 : vector<16x1xf32>
    %562 = vector.extract_strided_slice %0 {offsets = [0, 3], sizes = [16, 1], strides = [1, 1]} : vector<16x4xf32> to vector<16x1xf32>
    %c112 = arith.constant 112 : index
    %563 = memref.load %arg1[%c112] : memref<130xf32, #tpu.memory_space<smem>>
    %564 = vector.broadcast %563 : f32 to vector<16x1xf32>
    %565 = arith.mulf %562, %564 : vector<16x1xf32>
    %566 = arith.addf %561, %565 : vector<16x1xf32>
    %c120 = arith.constant 120 : index
    %567 = memref.load %arg1[%c120] : memref<130xf32, #tpu.memory_space<smem>>
    %568 = vector.broadcast %567 : f32 to vector<16x1xf32>
    %569 = arith.addf %566, %568 : vector<16x1xf32>
    %570 = math.tanh %569 : vector<16x1xf32>
    %c128_7 = arith.constant 128 : index
    %571 = memref.load %arg1[%c128_7] : memref<130xf32, #tpu.memory_space<smem>>
    %572 = vector.broadcast %571 : f32 to vector<16x1xf32>
    %573 = arith.mulf %570, %572 : vector<16x1xf32>
    %574 = arith.addf %547, %573 : vector<16x1xf32>
    %c129 = arith.constant 129 : index
    %575 = memref.load %arg1[%c129] : memref<130xf32, #tpu.memory_space<smem>>
    %576 = vector.broadcast %575 : f32 to vector<16x1xf32>
    %577 = arith.addf %574, %576 : vector<16x1xf32>
    %578 = math.tanh %577 : vector<16x1xf32>
    %579 = vector.extract_strided_slice %0 {offsets = [0, 0], sizes = [16, 1], strides = [1, 1]} : vector<16x4xf32> to vector<16x1xf32>
    %580 = math.exp %579 : vector<16x1xf32>
    %cst = arith.constant 3.000000e+00 : f32
    %581 = vector.broadcast %cst : f32 to vector<16x1xf32>
    %582 = arith.mulf %581, %580 : vector<16x1xf32>
    %cst_8 = arith.constant 1.500000e+00 : f32
    %583 = vector.broadcast %cst_8 : f32 to vector<16x128xf32>
    %584 = arith.mulf %583, %4 : vector<16x128xf32>
    %cst_9 = arith.constant 5.000000e+00 : f32
    %585 = vector.broadcast %cst_9 : f32 to vector<16x128xf32>
    %586 = arith.addf %584, %585 : vector<16x128xf32>
    %c1_i32 = arith.constant 1 : i32
    %587 = tpu.dynamic_rotate %359 by %c1_i32 dim 1 : vector<16x128xf32>, i32 -> vector<16x128xf32>
    %c127_i32 = arith.constant 127 : i32
    %588 = tpu.dynamic_rotate %359 by %c127_i32 dim 1 : vector<16x128xf32>, i32 -> vector<16x128xf32>
    %589 = arith.subf %587, %588 : vector<16x128xf32>
    %590 = arith.mulf %586, %589 : vector<16x128xf32>
    %cst_10 = arith.constant dense<0.000000e+00> : vector<16xf32>
    %591 = vector.multi_reduction <add>, %590, %cst_10 [1] : vector<16x128xf32> to vector<16xf32>
    %592 = vector.shape_cast %591 : vector<16xf32> to vector<16x1xf32>
    %cst_11 = arith.constant 2.000000e+00 : f32
    %593 = vector.broadcast %cst_11 : f32 to vector<16x1xf32>
    %594 = arith.mulf %593, %592 : vector<16x1xf32>
    %cst_12 = arith.constant 1.000000e-01 : f32
    %595 = vector.broadcast %cst_12 : f32 to vector<16x1xf32>
    %596 = arith.mulf %595, %578 : vector<16x1xf32>
    %cst_13 = arith.constant 5.000000e-01 : f32
    %597 = vector.broadcast %cst_13 : f32 to vector<16x1xf32>
    %598 = arith.addf %597, %596 : vector<16x1xf32>
    %599 = arith.mulf %582, %598 : vector<16x1xf32>
    %600 = math.absf %594 : vector<16x1xf32>
    %601 = arith.mulf %599, %600 : vector<16x1xf32>
    %602 = math.log %601 : vector<16x1xf32>
    %c0_14 = arith.constant 0 : index
    %c0_15 = arith.constant 0 : index
    %603 = vector.load %arg4[%c0_14, %c0_15] : memref<16x1xf32, #tpu.memory_space<vmem>>, vector<16x1xf32>
    tpu.vector_store %arg4[%c0_14, %c0_15], %602 {strides = array<i32>} : memref<16x1xf32, #tpu.memory_space<vmem>>, vector<16x1xf32>,
    %604 = tpu.transpose %359, [1, 0] : vector<16x128xf32> -> vector<128x16xf32>
    %c0_16 = arith.constant 0 : index
    %c0_17 = arith.constant 0 : index
    %605 = vector.load %arg5[%c0_16, %c0_17] : memref<128x16xf32, #tpu.memory_space<vmem>>, vector<128x16xf32>
    tpu.vector_store %arg5[%c0_16, %c0_17], %604 {strides = array<i32>} : memref<128x16xf32, #tpu.memory_space<vmem>>, vector<128x16xf32>,
    return
  }
  func.func @transform_0(%arg0: i32, %arg1: memref<130xf32, #tpu.memory_space<smem>>) -> (i32, i32) {
    %c0_i32 = arith.constant 0 : i32
    %c0_i32_0 = arith.constant 0 : i32
    return %arg0, %c0_i32 : i32, i32
  }
  func.func @transform_1(%arg0: i32, %arg1: memref<130xf32, #tpu.memory_space<smem>>) -> (i32, i32) {
    %c0_i32 = arith.constant 0 : i32
    %c0_i32_0 = arith.constant 0 : i32
    return %arg0, %c0_i32 : i32, i32
  }
  func.func @transform_2(%arg0: i32, %arg1: memref<130xf32, #tpu.memory_space<smem>>) -> (i32, i32) {
    %c0_i32 = arith.constant 0 : i32
    %c0_i32_0 = arith.constant 0 : i32
    return %arg0, %c0_i32 : i32, i32
  }
  func.func @transform_3(%arg0: i32, %arg1: memref<130xf32, #tpu.memory_space<smem>>) -> (i32, i32) {
    %c0_i32 = arith.constant 0 : i32
    %c0_i32_0 = arith.constant 0 : i32
    return %c0_i32, %arg0 : i32, i32
  }
}

</mosaic_0001>

<llo_original>
// kernel: tpu_custom_call.1
$region0: #{tpu_custom_call.1}
  #allocation0 [shape = 'u32[]', space=smem, size = 0x4, offset = 0x4, fixed_abs, tag = 'smem constant byte address 0x4 - core index']
  #allocation1 [shape = 'u32[144,128]{1,0:T(1,128)}', space=vmem, size = 0x12000, scoped, tag = 'internal scratch']
  #allocation2 [shape = 's32[1]{0}', space=sflag, size = 0x4, scoped, tag = 'scoped memory for tpu_custom_call.1']
  #allocation3 [shape = 'u8[1024]{0}', space=smem, size = 0x400, scoped, tag = 'prefetched SMEM operand 0']
  %s0 = inlined_call_operand.vmem [shape: f32[130], index: 0, kind: input, shape index: {}]
  %s1 = inlined_call_operand.hbm [shape: f32[16,512], index: 1, kind: input, shape index: {}]
  %s2 = inlined_call_operand.vmem [shape: f32[16,4], index: 2, kind: input, shape index: {}]
  %s3 = inlined_call_operand.vmem [shape: f32[16,1], index: 3, kind: output, shape index: {0}]
  %s4 = inlined_call_operand.vmem [shape: f32[128,16], index: 4, kind: output, shape index: {1}]
  %5 = xla_tuple %s3, %s4
  %s6 = sld [smem:[#allocation0]]
  $region30: #{tpu_custom_call.1} parent=0
    _
  %s8 = ssub.s32 1, %s6
  %s9 = scalar_select 0, %s8, %s6
  %s10 = sshll.u32 %s0, 4
  %s11 = int_to_ptr.vmem [resolvable:$true] %s10
  %13 = dma.vmem_to_smem %s11, 32, [#allocation3], [#allocation2]
  %14 = dma.done [#allocation2], 32
  %15 = sfence
  $region1: #{tpu_custom_call.1} parent=0
    #allocation4 [shape = 'u8[32768]{0}', space=vmem, size = 0x8000, scoped, tag = 'input window, operand 1, single buffered']
    #allocation5 [shape = 's32[1]{0}', space=sflag, size = 0x4, scoped, tag = 'scoped memory for tpu_custom_call.1']
    %16 = vsyncpa [#allocation5], 0
    // Predicated region
    $region2: #{tpu_custom_call.1} parent=1 // pred_check
      _
    $region3: #{tpu_custom_call.1} parent=1 // pred_check_branch
      %18 = sbr.rel (0) target = $region5
    $region4: #{tpu_custom_call.1} parent=1 // pred_region
      %s20 = ssub.s32 1024, 1024
      %21 = vsyncadd [#allocation5], %s20
      %s22 = sshll.u32 [#allocation4], 4
      %s23 = int_to_ptr.vmem [resolvable:$true] %s22
      %28 = dma.hbm_to_vmem [thread:$0]  %s1, 1024, %s23, [#allocation5], 512, 512, 32
    $region5: #{tpu_custom_call.1} parent=1 // pred_fallthru
      _
    // Predicated region
    $region6: #{tpu_custom_call.1} parent=1 // pred_check
      _
    $region7: #{tpu_custom_call.1} parent=1 // pred_check_branch
      %30 = sbr.rel (0) target = $region9
    $region8: #{tpu_custom_call.1} parent=1 // pred_region
      _
    $region9: #{tpu_custom_call.1} parent=1 // pred_fallthru
      _
    // Predicated region
    $region10: #{tpu_custom_call.1} parent=1 // pred_check
      _
    $region11: #{tpu_custom_call.1} parent=1 // pred_check_branch
      %32 = sbr.rel (0) target = $region13
    $region12: #{tpu_custom_call.1} parent=1 // pred_region
      %33 = dma.done [#allocation5], 1024
    $region13: #{tpu_custom_call.1} parent=1 // pred_fallthru
      _
    %v34 = vld [vmem:[%s2] sm:$0xff]
    %v35 = vld [vmem:[%s2 + $0x8] sm:$0xff]
    %v36 = vld [vmem:[#allocation4] sm:$0xff]
    %v37 = vld [vmem:[#allocation4 + $0x20] sm:$0xff]
    %v38 = vld [vmem:[#allocation4 + $0x8] sm:$0xff]
    %v39 = vld [vmem:[#allocation4 + $0x28] sm:$0xff]
    %v40 = vld [vmem:[#allocation4 + $0x10] sm:$0xff]
    %v41 = vld [vmem:[#allocation4 + $0x30] sm:$0xff]
    %v42 = vld [vmem:[#allocation4 + $0x18] sm:$0xff]
    %v43 = vld [vmem:[#allocation4 + $0x38] sm:$0xff]
    %s44 = sld [smem:[#allocation3]]
    %v45 = vstv %s44
    %v46 = vmul.f32 %v36, %v45
    %v47 = vmul.f32 %v37, %v45
    %s48 = sld [smem:[#allocation3 + $0x8]]
    %v49 = vstv %s48
    %v50 = vmul.f32 %v38, %v49
    %v51 = vmul.f32 %v39, %v49
    %v52 = vadd.f32 %v46, %v50
    %v53 = vadd.f32 %v47, %v51
    %s54 = sld [smem:[#allocation3 + $0x10]]
    %v55 = vstv %s54
    %v56 = vmul.f32 %v40, %v55
    %v57 = vmul.f32 %v41, %v55
    %v58 = vadd.f32 %v52, %v56
    %v59 = vadd.f32 %v53, %v57
    %s60 = sld [smem:[#allocation3 + $0x18]]
    %v61 = vstv %s60
    %v62 = vmul.f32 %v42, %v61
    %v63 = vmul.f32 %v43, %v61
    %v64 = vadd.f32 %v58, %v62
    %v65 = vadd.f32 %v59, %v63
    %s66 = sld [smem:[#allocation3 + $0x20]]
    %v67 = vstv %s66
    %v68 = vmul.f32 %v34, %v67
    %v69 = vmul.f32 %v35, %v67
    %s70 = sld [smem:[#allocation3 + $0x28]]
    %v71 = vstv %s70
    %v72 = vmul.f32 %v34, %v71
    %v73 = vmul.f32 %v35, %v71
    %76 = vrot.lane.b32.xlu0 %v72, 127
    %v77 = vpop.permute.xlu0 %76
    %78 = vrot.lane.b32.xlu0 %v73, 127
    %v79 = vpop.permute.xlu0 %78
    %v82 = vadd.f32 %v68, %v77
    %v83 = vadd.f32 %v69, %v79
    %s84 = sld [smem:[#allocation3 + $0x30]]
    %v85 = vstv %s84
    %v86 = vmul.f32 %v34, %v85
    %v87 = vmul.f32 %v35, %v85
    %90 = vrot.lane.b32.xlu0 %v86, 126
    %v91 = vpop.permute.xlu0 %90
    %92 = vrot.lane.b32.xlu0 %v87, 126
    %v93 = vpop.permute.xlu0 %92
    %v96 = vadd.f32 %v82, %v91
    %v97 = vadd.f32 %v83, %v93
    %s98 = sld [smem:[#allocation3 + $0x38]]
    %v99 = vstv %s98
    %v100 = vmul.f32 %v34, %v99
    %v101 = vmul.f32 %v35, %v99
    %104 = vrot.lane.b32.xlu0 %v100, 125
    %v105 = vpop.permute.xlu0 %104
    %106 = vrot.lane.b32.xlu0 %v101, 125
    %v107 = vpop.permute.xlu0 %106
    %v110 = vadd.f32 %v96, %v105
    %v111 = vadd.f32 %v97, %v107
    %s112 = sld [smem:[#allocation3 + $0x40]]
    %v113 = vstv %s112
    %v114 = vadd.f32 %v110, %v113
    %v115 = vadd.f32 %v111, %v113
    %117 = vset.pattern.permute.xlu0 0
    %118 = vperm.xlu0 %117, %v114
    %v119 = vpop.permute.xlu0 %118
    %122 = vset.pattern.permute.xlu0 0
    %123 = vperm.xlu0 %122, %v115
    %v124 = vpop.permute.xlu0 %123
    %v126 = vadd.f32 %v64, %v119
    %v127 = vadd.f32 %v65, %v124
    %v128 = vtanh.pop %v126
    %v129 = vtanh.pop %v127
    %s130 = sld [smem:[#allocation3 + $0x48]]
    %v131 = vstv %s130
    %v132 = vmul.f32 %v128, %v131
    %v133 = vmul.f32 %v129, %v131
    %s134 = sld [smem:[#allocation3 + $0x1]]
    %v135 = vstv %s134
    %v136 = vmul.f32 %v36, %v135
    %v137 = vmul.f32 %v37, %v135
    %s138 = sld [smem:[#allocation3 + $0x9]]
    %v139 = vstv %s138
    %v140 = vmul.f32 %v38, %v139
    %v141 = vmul.f32 %v39, %v139
    %v142 = vadd.f32 %v136, %v140
    %v143 = vadd.f32 %v137, %v141
    %s144 = sld [smem:[#allocation3 + $0x11]]
    %v145 = vstv %s144
    %v146 = vmul.f32 %v40, %v145
    %v147 = vmul.f32 %v41, %v145
    %v148 = vadd.f32 %v142, %v146
    %v149 = vadd.f32 %v143, %v147
    %s150 = sld [smem:[#allocation3 + $0x19]]
    %v151 = vstv %s150
    %v152 = vmul.f32 %v42, %v151
    %v153 = vmul.f32 %v43, %v151
    %v154 = vadd.f32 %v148, %v152
    %v155 = vadd.f32 %v149, %v153
    %s156 = sld [smem:[#allocation3 + $0x21]]
    %v157 = vstv %s156
    %v158 = vmul.f32 %v34, %v157
    %v159 = vmul.f32 %v35, %v157
    %s160 = sld [smem:[#allocation3 + $0x29]]
    %v161 = vstv %s160
    %v162 = vmul.f32 %v34, %v161
    %v163 = vmul.f32 %v35, %v161
    %166 = vrot.lane.b32.xlu0 %v162, 127
    %v167 = vpop.permute.xlu0 %166
    %168 = vrot.lane.b32.xlu0 %v163, 127
    %v169 = vpop.permute.xlu0 %168
    %v172 = vadd.f32 %v158, %v167
    %v173 = vadd.f32 %v159, %v169
    %s174 = sld [smem:[#allocation3 + $0x31]]
    %v175 = vstv %s174
    %v176 = vmul.f32 %v34, %v175
    %v177 = vmul.f32 %v35, %v175
    %180 = vrot.lane.b32.xlu0 %v176, 126
    %v181 = vpop.permute.xlu0 %180
    %182 = vrot.lane.b32.xlu0 %v177, 126
    %v183 = vpop.permute.xlu0 %182
    %v186 = vadd.f32 %v172, %v181
    %v187 = vadd.f32 %v173, %v183
    %s188 = sld [smem:[#allocation3 + $0x39]]
    %v189 = vstv %s188
    %v190 = vmul.f32 %v34, %v189
    %v191 = vmul.f32 %v35, %v189
    %194 = vrot.lane.b32.xlu0 %v190, 125
    %v195 = vpop.permute.xlu0 %194
    %196 = vrot.lane.b32.xlu0 %v191, 125
    %v197 = vpop.permute.xlu0 %196
    %v200 = vadd.f32 %v186, %v195
    %v201 = vadd.f32 %v187, %v197
    %s202 = sld [smem:[#allocation3 + $0x41]]
    %v203 = vstv %s202
    %v204 = vadd.f32 %v200, %v203
    %v205 = vadd.f32 %v201, %v203
    %207 = vset.pattern.permute.xlu0 0
    %208 = vperm.xlu0 %207, %v204
    %v209 = vpop.permute.xlu0 %208
    %212 = vset.pattern.permute.xlu0 0
    %213 = vperm.xlu0 %212, %v205
    %v214 = vpop.permute.xlu0 %213
    %v216 = vadd.f32 %v154, %v209
    %v217 = vadd.f32 %v155, %v214
    %v218 = vtanh.pop %v216
    %v219 = vtanh.pop %v217
    %s220 = sld [smem:[#allocation3 + $0x49]]
    %v221 = vstv %s220
    %v222 = vmul.f32 %v218, %v221
    %v223 = vmul.f32 %v219, %v221
    %v224 = vadd.f32 %v132, %v222
    %v225 = vadd.f32 %v133, %v223
    %s226 = sld [smem:[#allocation3 + $0x2]]
    %v227 = vstv %s226
    %v228 = vmul.f32 %v36, %v227
    %v229 = vmul.f32 %v37, %v227
    %s230 = sld [smem:[#allocation3 + $0xa]]
    %v231 = vstv %s230
    %v232 = vmul.f32 %v38, %v231
    %v233 = vmul.f32 %v39, %v231
    %v234 = vadd.f32 %v228, %v232
    %v235 = vadd.f32 %v229, %v233
    %s236 = sld [smem:[#allocation3 + $0x12]]
    %v237 = vstv %s236
    %v238 = vmul.f32 %v40, %v237
    %v239 = vmul.f32 %v41, %v237
    %v240 = vadd.f32 %v234, %v238
    %v241 = vadd.f32 %v235, %v239
    %s242 = sld [smem:[#allocation3 + $0x1a]]
    %v243 = vstv %s242
    %v244 = vmul.f32 %v42, %v243
    %v245 = vmul.f32 %v43, %v243
    %v246 = vadd.f32 %v240, %v244
    %v247 = vadd.f32 %v241, %v245
    %s248 = sld [smem:[#allocation3 + $0x22]]
    %v249 = vstv %s248
    %v250 = vmul.f32 %v34, %v249
    %v251 = vmul.f32 %v35, %v249
    %s252 = sld [smem:[#allocation3 + $0x2a]]
    %v253 = vstv %s252
    %v254 = vmul.f32 %v34, %v253
    %v255 = vmul.f32 %v35, %v253
    %258 = vrot.lane.b32.xlu0 %v254, 127
    %v259 = vpop.permute.xlu0 %258
    %260 = vrot.lane.b32.xlu0 %v255, 127
    %v261 = vpop.permute.xlu0 %260
    %v264 = vadd.f32 %v250, %v259
    %v265 = vadd.f32 %v251, %v261
    %s266 = sld [smem:[#allocation3 + $0x32]]
    %v267 = vstv %s266
    %v268 = vmul.f32 %v34, %v267
    %v269 = vmul.f32 %v35, %v267
    %272 = vrot.lane.b32.xlu0 %v268, 126
    %v273 = vpop.permute.xlu0 %272
    %274 = vrot.lane.b32.xlu0 %v269, 126
    %v275 = vpop.permute.xlu0 %274
    %v278 = vadd.f32 %v264, %v273
    %v279 = vadd.f32 %v265, %v275
    %s280 = sld [smem:[#allocation3 + $0x3a]]
    %v281 = vstv %s280
    %v282 = vmul.f32 %v34, %v281
    %v283 = vmul.f32 %v35, %v281
    %286 = vrot.lane.b32.xlu0 %v282, 125
    %v287 = vpop.permute.xlu0 %286
    %288 = vrot.lane.b32.xlu0 %v283, 125
    %v289 = vpop.permute.xlu0 %288
    %v292 = vadd.f32 %v278, %v287
    %v293 = vadd.f32 %v279, %v289
    %s294 = sld [smem:[#allocation3 + $0x42]]
    %v295 = vstv %s294
    %v296 = vadd.f32 %v292, %v295
    %v297 = vadd.f32 %v293, %v295
    %299 = vset.pattern.permute.xlu0 0
    %300 = vperm.xlu0 %299, %v296
    %v301 = vpop.permute.xlu0 %300
    %304 = vset.pattern.permute.xlu0 0
    %305 = vperm.xlu0 %304, %v297
    %v306 = vpop.permute.xlu0 %305
    %v308 = vadd.f32 %v246, %v301
    %v309 = vadd.f32 %v247, %v306
    %v310 = vtanh.pop %v308
    %v311 = vtanh.pop %v309
    %s312 = sld [smem:[#allocation3 + $0x4a]]
    %v313 = vstv %s312
    %v314 = vmul.f32 %v310, %v313
    %v315 = vmul.f32 %v311, %v313
    %v316 = vadd.f32 %v224, %v314
    %v317 = vadd.f32 %v225, %v315
    %s318 = sld [smem:[#allocation3 + $0x3]]
    %v319 = vstv %s318
    %v320 = vmul.f32 %v36, %v319
    %v321 = vmul.f32 %v37, %v319
    %s322 = sld [smem:[#allocation3 + $0xb]]
    %v323 = vstv %s322
    %v324 = vmul.f32 %v38, %v323
    %v325 = vmul.f32 %v39, %v323
    %v326 = vadd.f32 %v320, %v324
    %v327 = vadd.f32 %v321, %v325
    %s328 = sld [smem:[#allocation3 + $0x13]]
    %v329 = vstv %s328
    %v330 = vmul.f32 %v40, %v329
    %v331 = vmul.f32 %v41, %v329
    %v332 = vadd.f32 %v326, %v330
    %v333 = vadd.f32 %v327, %v331
    %s334 = sld [smem:[#allocation3 + $0x1b]]
    %v335 = vstv %s334
    %v336 = vmul.f32 %v42, %v335
    %v337 = vmul.f32 %v43, %v335
    %v338 = vadd.f32 %v332, %v336
    %v339 = vadd.f32 %v333, %v337
    %s340 = sld [smem:[#allocation3 + $0x23]]
    %v341 = vstv %s340
    %v342 = vmul.f32 %v34, %v341
    %v343 = vmul.f32 %v35, %v341
    %s344 = sld [smem:[#allocation3 + $0x2b]]
    %v345 = vstv %s344
    %v346 = vmul.f32 %v34, %v345
    %v347 = vmul.f32 %v35, %v345
    %350 = vrot.lane.b32.xlu0 %v346, 127
    %v351 = vpop.permute.xlu0 %350
    %352 = vrot.lane.b32.xlu0 %v347, 127
    %v353 = vpop.permute.xlu0 %352
    %v356 = vadd.f32 %v342, %v351
    %v357 = vadd.f32 %v343, %v353
    %s358 = sld [smem:[#allocation3 + $0x33]]
    %v359 = vstv %s358
    %v360 = vmul.f32 %v34, %v359
    %v361 = vmul.f32 %v35, %v359
    %364 = vrot.lane.b32.xlu0 %v360, 126
    %v365 = vpop.permute.xlu0 %364
    %366 = vrot.lane.b32.xlu0 %v361, 126
    %v367 = vpop.permute.xlu0 %366
    %v370 = vadd.f32 %v356, %v365
    %v371 = vadd.f32 %v357, %v367
    %s372 = sld [smem:[#allocation3 + $0x3b]]
    %v373 = vstv %s372
    %v374 = vmul.f32 %v34, %v373
    %v375 = vmul.f32 %v35, %v373
    %378 = vrot.lane.b32.xlu0 %v374, 125
    %v379 = vpop.permute.xlu0 %378
    %380 = vrot.lane.b32.xlu0 %v375, 125
    %v381 = vpop.permute.xlu0 %380
    %v384 = vadd.f32 %v370, %v379
    %v385 = vadd.f32 %v371, %v381
    %s386 = sld [smem:[#allocation3 + $0x43]]
    %v387 = vstv %s386
    %v388 = vadd.f32 %v384, %v387
    %v389 = vadd.f32 %v385, %v387
    %391 = vset.pattern.permute.xlu0 0
    %392 = vperm.xlu0 %391, %v388
    %v393 = vpop.permute.xlu0 %392
    %396 = vset.pattern.permute.xlu0 0
    %397 = vperm.xlu0 %396, %v389
    %v398 = vpop.permute.xlu0 %397
    %v400 = vadd.f32 %v338, %v393
    %v401 = vadd.f32 %v339, %v398
    %v402 = vtanh.pop %v400
    %v403 = vtanh.pop %v401
    %s404 = sld [smem:[#allocation3 + $0x4b]]
    %v405 = vstv %s404
    %v406 = vmul.f32 %v402, %v405
    %v407 = vmul.f32 %v403, %v405
    %v408 = vadd.f32 %v316, %v406
    %v409 = vadd.f32 %v317, %v407
    %s410 = sld [smem:[#allocation3 + $0x4]]
    %v411 = vstv %s410
    %v412 = vmul.f32 %v36, %v411
    %v413 = vmul.f32 %v37, %v411
    %s414 = sld [smem:[#allocation3 + $0xc]]
    %v415 = vstv %s414
    %v416 = vmul.f32 %v38, %v415
    %v417 = vmul.f32 %v39, %v415
    %v418 = vadd.f32 %v412, %v416
    %v419 = vadd.f32 %v413, %v417
    %s420 = sld [smem:[#allocation3 + $0x14]]
    %v421 = vstv %s420
    %v422 = vmul.f32 %v40, %v421
    %v423 = vmul.f32 %v41, %v421
    %v424 = vadd.f32 %v418, %v422
    %v425 = vadd.f32 %v419, %v423
    %s426 = sld [smem:[#allocation3 + $0x1c]]
    %v427 = vstv %s426
    %v428 = vmul.f32 %v42, %v427
    %v429 = vmul.f32 %v43, %v427
    %v430 = vadd.f32 %v424, %v428
    %v431 = vadd.f32 %v425, %v429
    %s432 = sld [smem:[#allocation3 + $0x24]]
    %v433 = vstv %s432
    %v434 = vmul.f32 %v34, %v433
    %v435 = vmul.f32 %v35, %v433
    %s436 = sld [smem:[#allocation3 + $0x2c]]
    %v437 = vstv %s436
    %v438 = vmul.f32 %v34, %v437
    %v439 = vmul.f32 %v35, %v437
    %442 = vrot.lane.b32.xlu0 %v438, 127
    %v443 = vpop.permute.xlu0 %442
    %444 = vrot.lane.b32.xlu0 %v439, 127
    %v445 = vpop.permute.xlu0 %444
    %v448 = vadd.f32 %v434, %v443
    %v449 = vadd.f32 %v435, %v445
    %s450 = sld [smem:[#allocation3 + $0x34]]
    %v451 = vstv %s450
    %v452 = vmul.f32 %v34, %v451
    %v453 = vmul.f32 %v35, %v451
    %456 = vrot.lane.b32.xlu0 %v452, 126
    %v457 = vpop.permute.xlu0 %456
    %458 = vrot.lane.b32.xlu0 %v453, 126
    %v459 = vpop.permute.xlu0 %458
    %v462 = vadd.f32 %v448, %v457
    %v463 = vadd.f32 %v449, %v459
    %s464 = sld [smem:[#allocation3 + $0x3c]]
    %v465 = vstv %s464
    %v466 = vmul.f32 %v34, %v465
    %v467 = vmul.f32 %v35, %v465
    %470 = vrot.lane.b32.xlu0 %v466, 125
    %v471 = vpop.permute.xlu0 %470
    %472 = vrot.lane.b32.xlu0 %v467, 125
    %v473 = vpop.permute.xlu0 %472
    %v476 = vadd.f32 %v462, %v471
    %v477 = vadd.f32 %v463, %v473
    %s478 = sld [smem:[#allocation3 + $0x44]]
    %v479 = vstv %s478
    %v480 = vadd.f32 %v476, %v479
    %v481 = vadd.f32 %v477, %v479
    %483 = vset.pattern.permute.xlu0 0
    %484 = vperm.xlu0 %483, %v480
    %v485 = vpop.permute.xlu0 %484
    %488 = vset.pattern.permute.xlu0 0
    %489 = vperm.xlu0 %488, %v481
    %v490 = vpop.permute.xlu0 %489
    %v492 = vadd.f32 %v430, %v485
    %v493 = vadd.f32 %v431, %v490
    %v494 = vtanh.pop %v492
    %v495 = vtanh.pop %v493
    %s496 = sld [smem:[#allocation3 + $0x4c]]
    %v497 = vstv %s496
    %v498 = vmul.f32 %v494, %v497
    %v499 = vmul.f32 %v495, %v497
    %v500 = vadd.f32 %v408, %v498
    %v501 = vadd.f32 %v409, %v499
    %s502 = sld [smem:[#allocation3 + $0x5]]
    %v503 = vstv %s502
    %v504 = vmul.f32 %v36, %v503
    %v505 = vmul.f32 %v37, %v503
    %s506 = sld [smem:[#allocation3 + $0xd]]
    %v507 = vstv %s506
    %v508 = vmul.f32 %v38, %v507
    %v509 = vmul.f32 %v39, %v507
    %v510 = vadd.f32 %v504, %v508
    %v511 = vadd.f32 %v505, %v509
    %s512 = sld [smem:[#allocation3 + $0x15]]
    %v513 = vstv %s512
    %v514 = vmul.f32 %v40, %v513
    %v515 = vmul.f32 %v41, %v513
    %v516 = vadd.f32 %v510, %v514
    %v517 = vadd.f32 %v511, %v515
    %s518 = sld [smem:[#allocation3 + $0x1d]]
    %v519 = vstv %s518
    %v520 = vmul.f32 %v42, %v519
    %v521 = vmul.f32 %v43, %v519
    %v522 = vadd.f32 %v516, %v520
    %v523 = vadd.f32 %v517, %v521
    %s524 = sld [smem:[#allocation3 + $0x25]]
    %v525 = vstv %s524
    %v526 = vmul.f32 %v34, %v525
    %v527 = vmul.f32 %v35, %v525
    %s528 = sld [smem:[#allocation3 + $0x2d]]
    %v529 = vstv %s528
    %v530 = vmul.f32 %v34, %v529
    %v531 = vmul.f32 %v35, %v529
    %534 = vrot.lane.b32.xlu0 %v530, 127
    %v535 = vpop.permute.xlu0 %534
    %536 = vrot.lane.b32.xlu0 %v531, 127
    %v537 = vpop.permute.xlu0 %536
    %v540 = vadd.f32 %v526, %v535
    %v541 = vadd.f32 %v527, %v537
    %s542 = sld [smem:[#allocation3 + $0x35]]
    %v543 = vstv %s542
    %v544 = vmul.f32 %v34, %v543
    %v545 = vmul.f32 %v35, %v543
    %548 = vrot.lane.b32.xlu0 %v544, 126
    %v549 = vpop.permute.xlu0 %548
    %550 = vrot.lane.b32.xlu0 %v545, 126
    %v551 = vpop.permute.xlu0 %550
    %v554 = vadd.f32 %v540, %v549
    %v555 = vadd.f32 %v541, %v551
    %s556 = sld [smem:[#allocation3 + $0x3d]]
    %v557 = vstv %s556
    %v558 = vmul.f32 %v34, %v557
    %v559 = vmul.f32 %v35, %v557
    %562 = vrot.lane.b32.xlu0 %v558, 125
    %v563 = vpop.permute.xlu0 %562
    %564 = vrot.lane.b32.xlu0 %v559, 125
    %v565 = vpop.permute.xlu0 %564
    %v568 = vadd.f32 %v554, %v563
    %v569 = vadd.f32 %v555, %v565
    %s570 = sld [smem:[#allocation3 + $0x45]]
    %v571 = vstv %s570
    %v572 = vadd.f32 %v568, %v571
    %v573 = vadd.f32 %v569, %v571
    %575 = vset.pattern.permute.xlu0 0
    %576 = vperm.xlu0 %575, %v572
    %v577 = vpop.permute.xlu0 %576
    %580 = vset.pattern.permute.xlu0 0
    %581 = vperm.xlu0 %580, %v573
    %v582 = vpop.permute.xlu0 %581
    %v584 = vadd.f32 %v522, %v577
    %v585 = vadd.f32 %v523, %v582
    %v586 = vtanh.pop %v584
    %v587 = vtanh.pop %v585
    %s588 = sld [smem:[#allocation3 + $0x4d]]
    %v589 = vstv %s588
    %v590 = vmul.f32 %v586, %v589
    %v591 = vmul.f32 %v587, %v589
    %v592 = vadd.f32 %v500, %v590
    %v593 = vadd.f32 %v501, %v591
    %s594 = sld [smem:[#allocation3 + $0x6]]
    %v595 = vstv %s594
    %v596 = vmul.f32 %v36, %v595
    %v597 = vmul.f32 %v37, %v595
    %s598 = sld [smem:[#allocation3 + $0xe]]
    %v599 = vstv %s598
    %v600 = vmul.f32 %v38, %v599
    %v601 = vmul.f32 %v39, %v599
    %v602 = vadd.f32 %v596, %v600
    %v603 = vadd.f32 %v597, %v601
    %s604 = sld [smem:[#allocation3 + $0x16]]
    %v605 = vstv %s604
    %v606 = vmul.f32 %v40, %v605
    %v607 = vmul.f32 %v41, %v605
    %v608 = vadd.f32 %v602, %v606
    %v609 = vadd.f32 %v603, %v607
    %s610 = sld [smem:[#allocation3 + $0x1e]]
    %v611 = vstv %s610
    %v612 = vmul.f32 %v42, %v611
    %v613 = vmul.f32 %v43, %v611
    %v614 = vadd.f32 %v608, %v612
    %v615 = vadd.f32 %v609, %v613
    %s616 = sld [smem:[#allocation3 + $0x26]]
    %v617 = vstv %s616
    %v618 = vmul.f32 %v34, %v617
    %v619 = vmul.f32 %v35, %v617
    %s620 = sld [smem:[#allocation3 + $0x2e]]
    %v621 = vstv %s620
    %v622 = vmul.f32 %v34, %v621
    %v623 = vmul.f32 %v35, %v621
    %626 = vrot.lane.b32.xlu0 %v622, 127
    %v627 = vpop.permute.xlu0 %626
    %628 = vrot.lane.b32.xlu0 %v623, 127
    %v629 = vpop.permute.xlu0 %628
    %v632 = vadd.f32 %v618, %v627
    %v633 = vadd.f32 %v619, %v629
    %s634 = sld [smem:[#allocation3 + $0x36]]
    %v635 = vstv %s634
    %v636 = vmul.f32 %v34, %v635
    %v637 = vmul.f32 %v35, %v635
    %640 = vrot.lane.b32.xlu0 %v636, 126
    %v641 = vpop.permute.xlu0 %640
    %642 = vrot.lane.b32.xlu0 %v637, 126
    %v643 = vpop.permute.xlu0 %642
    %v646 = vadd.f32 %v632, %v641
    %v647 = vadd.f32 %v633, %v643
    %s648 = sld [smem:[#allocation3 + $0x3e]]
    %v649 = vstv %s648
    %v650 = vmul.f32 %v34, %v649
    %v651 = vmul.f32 %v35, %v649
    %654 = vrot.lane.b32.xlu0 %v650, 125
    %v655 = vpop.permute.xlu0 %654
    %656 = vrot.lane.b32.xlu0 %v651, 125
    %v657 = vpop.permute.xlu0 %656
    %v660 = vadd.f32 %v646, %v655
    %v661 = vadd.f32 %v647, %v657
    %s662 = sld [smem:[#allocation3 + $0x46]]
    %v663 = vstv %s662
    %v664 = vadd.f32 %v660, %v663
    %v665 = vadd.f32 %v661, %v663
    %667 = vset.pattern.permute.xlu0 0
    %668 = vperm.xlu0 %667, %v664
    %v669 = vpop.permute.xlu0 %668
    %672 = vset.pattern.permute.xlu0 0
    %673 = vperm.xlu0 %672, %v665
    %v674 = vpop.permute.xlu0 %673
    %v676 = vadd.f32 %v614, %v669
    %v677 = vadd.f32 %v615, %v674
    %v678 = vtanh.pop %v676
    %v679 = vtanh.pop %v677
    %s680 = sld [smem:[#allocation3 + $0x4e]]
    %v681 = vstv %s680
    %v682 = vmul.f32 %v678, %v681
    %v683 = vmul.f32 %v679, %v681
    %v684 = vadd.f32 %v592, %v682
    %v685 = vadd.f32 %v593, %v683
    %s686 = sld [smem:[#allocation3 + $0x7]]
    %v687 = vstv %s686
    %v688 = vmul.f32 %v36, %v687
    %v689 = vmul.f32 %v37, %v687
    %s690 = sld [smem:[#allocation3 + $0xf]]
    %v691 = vstv %s690
    %v692 = vmul.f32 %v38, %v691
    %v693 = vmul.f32 %v39, %v691
    %v694 = vadd.f32 %v688, %v692
    %v695 = vadd.f32 %v689, %v693
    %s696 = sld [smem:[#allocation3 + $0x17]]
    %v697 = vstv %s696
    %v698 = vmul.f32 %v40, %v697
    %v699 = vmul.f32 %v41, %v697
    %v700 = vadd.f32 %v694, %v698
    %v701 = vadd.f32 %v695, %v699
    %s702 = sld [smem:[#allocation3 + $0x1f]]
    %v703 = vstv %s702
    %v704 = vmul.f32 %v42, %v703
    %v705 = vmul.f32 %v43, %v703
    %v706 = vadd.f32 %v700, %v704
    %v707 = vadd.f32 %v701, %v705
    %s708 = sld [smem:[#allocation3 + $0x27]]
    %v709 = vstv %s708
    %v710 = vmul.f32 %v34, %v709
    %v711 = vmul.f32 %v35, %v709
    %s712 = sld [smem:[#allocation3 + $0x2f]]
    %v713 = vstv %s712
    %v714 = vmul.f32 %v34, %v713
    %v715 = vmul.f32 %v35, %v713
    %718 = vrot.lane.b32.xlu0 %v714, 127
    %v719 = vpop.permute.xlu0 %718
    %720 = vrot.lane.b32.xlu0 %v715, 127
    %v721 = vpop.permute.xlu0 %720
    %v724 = vadd.f32 %v710, %v719
    %v725 = vadd.f32 %v711, %v721
    %s726 = sld [smem:[#allocation3 + $0x37]]
    %v727 = vstv %s726
    %v728 = vmul.f32 %v34, %v727
    %v729 = vmul.f32 %v35, %v727
    %732 = vrot.lane.b32.xlu0 %v728, 126
    %v733 = vpop.permute.xlu0 %732
    %734 = vrot.lane.b32.xlu0 %v729, 126
    %v735 = vpop.permute.xlu0 %734
    %v738 = vadd.f32 %v724, %v733
    %v739 = vadd.f32 %v725, %v735
    %s740 = sld [smem:[#allocation3 + $0x3f]]
    %v741 = vstv %s740
    %v742 = vmul.f32 %v34, %v741
    %v743 = vmul.f32 %v35, %v741
    %746 = vrot.lane.b32.xlu0 %v742, 125
    %v747 = vpop.permute.xlu0 %746
    %748 = vrot.lane.b32.xlu0 %v743, 125
    %v749 = vpop.permute.xlu0 %748
    %v752 = vadd.f32 %v738, %v747
    %v753 = vadd.f32 %v739, %v749
    %s754 = sld [smem:[#allocation3 + $0x47]]
    %v755 = vstv %s754
    %v756 = vadd.f32 %v752, %v755
    %v757 = vadd.f32 %v753, %v755
    %759 = vset.pattern.permute.xlu0 0
    %760 = vperm.xlu0 %759, %v756
    %v761 = vpop.permute.xlu0 %760
    %764 = vset.pattern.permute.xlu0 0
    %765 = vperm.xlu0 %764, %v757
    %v766 = vpop.permute.xlu0 %765
    %v768 = vadd.f32 %v706, %v761
    %v769 = vadd.f32 %v707, %v766
    %v770 = vtanh.pop %v768
    %v771 = vtanh.pop %v769
    %s772 = sld [smem:[#allocation3 + $0x4f]]
    %v773 = vstv %s772
    %v774 = vmul.f32 %v770, %v773
    %v775 = vmul.f32 %v771, %v773
    %v776 = vadd.f32 %v684, %v774
    %v777 = vadd.f32 %v685, %v775
    %s778 = sld [smem:[#allocation3 + $0x50]]
    %v779 = vstv %s778
    %v780 = vadd.f32 %v776, %v779
    %v781 = vadd.f32 %v777, %v779
    %v782 = vtanh.pop %v780
    %v783 = vtanh.pop %v781
    %s784 = sld [smem:[#allocation3 + $0x51]]
    %v785 = vstv %s784
    %v786 = vmul.f32 %v34, %v785
    %v787 = vmul.f32 %v35, %v785
    %s788 = sld [smem:[#allocation3 + $0x59]]
    %v789 = vstv %s788
    %v790 = vmul.f32 %v34, %v789
    %v791 = vmul.f32 %v35, %v789
    %794 = vrot.lane.b32.xlu0 %v790, 127
    %v795 = vpop.permute.xlu0 %794
    %796 = vrot.lane.b32.xlu0 %v791, 127
    %v797 = vpop.permute.xlu0 %796
    %v800 = vadd.f32 %v786, %v795
    %v801 = vadd.f32 %v787, %v797
    %s802 = sld [smem:[#allocation3 + $0x61]]
    %v803 = vstv %s802
    %v804 = vmul.f32 %v34, %v803
    %v805 = vmul.f32 %v35, %v803
    %808 = vrot.lane.b32.xlu0 %v804, 126
    %v809 = vpop.permute.xlu0 %808
    %810 = vrot.lane.b32.xlu0 %v805, 126
    %v811 = vpop.permute.xlu0 %810
    %v814 = vadd.f32 %v800, %v809
    %v815 = vadd.f32 %v801, %v811
    %s816 = sld [smem:[#allocation3 + $0x69]]
    %v817 = vstv %s816
    %v818 = vmul.f32 %v34, %v817
    %v819 = vmul.f32 %v35, %v817
    %822 = vrot.lane.b32.xlu0 %v818, 125
    %v823 = vpop.permute.xlu0 %822
    %824 = vrot.lane.b32.xlu0 %v819, 125
    %v825 = vpop.permute.xlu0 %824
    %v828 = vadd.f32 %v814, %v823
    %v829 = vadd.f32 %v815, %v825
    %s830 = sld [smem:[#allocation3 + $0x71]]
    %v831 = vstv %s830
    %v832 = vadd.f32 %v828, %v831
    %v833 = vadd.f32 %v829, %v831
    %v834 = vtanh.pop %v832
    %v835 = vtanh.pop %v833
    %s836 = sld [smem:[#allocation3 + $0x79]]
    %v837 = vstv %s836
    %v838 = vmul.f32 %v834, %v837
    %v839 = vmul.f32 %v835, %v837
    %s840 = sld [smem:[#allocation3 + $0x52]]
    %v841 = vstv %s840
    %v842 = vmul.f32 %v34, %v841
    %v843 = vmul.f32 %v35, %v841
    %s844 = sld [smem:[#allocation3 + $0x5a]]
    %v845 = vstv %s844
    %v846 = vmul.f32 %v34, %v845
    %v847 = vmul.f32 %v35, %v845
    %850 = vrot.lane.b32.xlu0 %v846, 127
    %v851 = vpop.permute.xlu0 %850
    %852 = vrot.lane.b32.xlu0 %v847, 127
    %v853 = vpop.permute.xlu0 %852
    %v856 = vadd.f32 %v842, %v851
    %v857 = vadd.f32 %v843, %v853
    %s858 = sld [smem:[#allocation3 + $0x62]]
    %v859 = vstv %s858
    %v860 = vmul.f32 %v34, %v859
    %v861 = vmul.f32 %v35, %v859
    %864 = vrot.lane.b32.xlu0 %v860, 126
    %v865 = vpop.permute.xlu0 %864
    %866 = vrot.lane.b32.xlu0 %v861, 126
    %v867 = vpop.permute.xlu0 %866
    %v870 = vadd.f32 %v856, %v865
    %v871 = vadd.f32 %v857, %v867
    %s872 = sld [smem:[#allocation3 + $0x6a]]
    %v873 = vstv %s872
    %v874 = vmul.f32 %v34, %v873
    %v875 = vmul.f32 %v35, %v873
    %878 = vrot.lane.b32.xlu0 %v874, 125
    %v879 = vpop.permute.xlu0 %878
    %880 = vrot.lane.b32.xlu0 %v875, 125
    %v881 = vpop.permute.xlu0 %880
    %v884 = vadd.f32 %v870, %v879
    %v885 = vadd.f32 %v871, %v881
    %s886 = sld [smem:[#allocation3 + $0x72]]
    %v887 = vstv %s886
    %v888 = vadd.f32 %v884, %v887
    %v889 = vadd.f32 %v885, %v887
    %v890 = vtanh.pop %v888
    %v891 = vtanh.pop %v889
    %s892 = sld [smem:[#allocation3 + $0x7a]]
    %v893 = vstv %s892
    %v894 = vmul.f32 %v890, %v893
    %v895 = vmul.f32 %v891, %v893
    %v896 = vadd.f32 %v838, %v894
    %v897 = vadd.f32 %v839, %v895
    %s898 = sld [smem:[#allocation3 + $0x53]]
    %v899 = vstv %s898
    %v900 = vmul.f32 %v34, %v899
    %v901 = vmul.f32 %v35, %v899
    %s902 = sld [smem:[#allocation3 + $0x5b]]
    %v903 = vstv %s902
    %v904 = vmul.f32 %v34, %v903
    %v905 = vmul.f32 %v35, %v903
    %908 = vrot.lane.b32.xlu0 %v904, 127
    %v909 = vpop.permute.xlu0 %908
    %910 = vrot.lane.b32.xlu0 %v905, 127
    %v911 = vpop.permute.xlu0 %910
    %v914 = vadd.f32 %v900, %v909
    %v915 = vadd.f32 %v901, %v911
    %s916 = sld [smem:[#allocation3 + $0x63]]
    %v917 = vstv %s916
    %v918 = vmul.f32 %v34, %v917
    %v919 = vmul.f32 %v35, %v917
    %922 = vrot.lane.b32.xlu0 %v918, 126
    %v923 = vpop.permute.xlu0 %922
    %924 = vrot.lane.b32.xlu0 %v919, 126
    %v925 = vpop.permute.xlu0 %924
    %v928 = vadd.f32 %v914, %v923
    %v929 = vadd.f32 %v915, %v925
    %s930 = sld [smem:[#allocation3 + $0x6b]]
    %v931 = vstv %s930
    %v932 = vmul.f32 %v34, %v931
    %v933 = vmul.f32 %v35, %v931
    %936 = vrot.lane.b32.xlu0 %v932, 125
    %v937 = vpop.permute.xlu0 %936
    %938 = vrot.lane.b32.xlu0 %v933, 125
    %v939 = vpop.permute.xlu0 %938
    %v942 = vadd.f32 %v928, %v937
    %v943 = vadd.f32 %v929, %v939
    %s944 = sld [smem:[#allocation3 + $0x73]]
    %v945 = vstv %s944
    %v946 = vadd.f32 %v942, %v945
    %v947 = vadd.f32 %v943, %v945
    %v948 = vtanh.pop %v946
    %v949 = vtanh.pop %v947
    %s950 = sld [smem:[#allocation3 + $0x7b]]
    %v951 = vstv %s950
    %v952 = vmul.f32 %v948, %v951
    %v953 = vmul.f32 %v949, %v951
    %v954 = vadd.f32 %v896, %v952
    %v955 = vadd.f32 %v897, %v953
    %s956 = sld [smem:[#allocation3 + $0x54]]
    %v957 = vstv %s956
    %v958 = vmul.f32 %v34, %v957
    %v959 = vmul.f32 %v35, %v957
    %s960 = sld [smem:[#allocation3 + $0x5c]]
    %v961 = vstv %s960
    %v962 = vmul.f32 %v34, %v961
    %v963 = vmul.f32 %v35, %v961
    %966 = vrot.lane.b32.xlu0 %v962, 127
    %v967 = vpop.permute.xlu0 %966
    %968 = vrot.lane.b32.xlu0 %v963, 127
    %v969 = vpop.permute.xlu0 %968
    %v972 = vadd.f32 %v958, %v967
    %v973 = vadd.f32 %v959, %v969
    %s974 = sld [smem:[#allocation3 + $0x64]]
    %v975 = vstv %s974
    %v976 = vmul.f32 %v34, %v975
    %v977 = vmul.f32 %v35, %v975
    %980 = vrot.lane.b32.xlu0 %v976, 126
    %v981 = vpop.permute.xlu0 %980
    %982 = vrot.lane.b32.xlu0 %v977, 126
    %v983 = vpop.permute.xlu0 %982
    %v986 = vadd.f32 %v972, %v981
    %v987 = vadd.f32 %v973, %v983
    %s988 = sld [smem:[#allocation3 + $0x6c]]
    %v989 = vstv %s988
    %v990 = vmul.f32 %v34, %v989
    %v991 = vmul.f32 %v35, %v989
    %994 = vrot.lane.b32.xlu0 %v990, 125
    %v995 = vpop.permute.xlu0 %994
    %996 = vrot.lane.b32.xlu0 %v991, 125
    %v997 = vpop.permute.xlu0 %996
    %v1000 = vadd.f32 %v986, %v995
    %v1001 = vadd.f32 %v987, %v997
    %s1002 = sld [smem:[#allocation3 + $0x74]]
    %v1003 = vstv %s1002
    %v1004 = vadd.f32 %v1000, %v1003
    %v1005 = vadd.f32 %v1001, %v1003
    %v1006 = vtanh.pop %v1004
    %v1007 = vtanh.pop %v1005
    %s1008 = sld [smem:[#allocation3 + $0x7c]]
    %v1009 = vstv %s1008
    %v1010 = vmul.f32 %v1006, %v1009
    %v1011 = vmul.f32 %v1007, %v1009
    %v1012 = vadd.f32 %v954, %v1010
    %v1013 = vadd.f32 %v955, %v1011
    %s1014 = sld [smem:[#allocation3 + $0x55]]
    %v1015 = vstv %s1014
    %v1016 = vmul.f32 %v34, %v1015
    %v1017 = vmul.f32 %v35, %v1015
    %s1018 = sld [smem:[#allocation3 + $0x5d]]
    %v1019 = vstv %s1018
    %v1020 = vmul.f32 %v34, %v1019
    %v1021 = vmul.f32 %v35, %v1019
    %1024 = vrot.lane.b32.xlu0 %v1020, 127
    %v1025 = vpop.permute.xlu0 %1024
    %1026 = vrot.lane.b32.xlu0 %v1021, 127
    %v1027 = vpop.permute.xlu0 %1026
    %v1030 = vadd.f32 %v1016, %v1025
    %v1031 = vadd.f32 %v1017, %v1027
    %s1032 = sld [smem:[#allocation3 + $0x65]]
    %v1033 = vstv %s1032
    %v1034 = vmul.f32 %v34, %v1033
    %v1035 = vmul.f32 %v35, %v1033
    %1038 = vrot.lane.b32.xlu0 %v1034, 126
    %v1039 = vpop.permute.xlu0 %1038
    %1040 = vrot.lane.b32.xlu0 %v1035, 126
    %v1041 = vpop.permute.xlu0 %1040
    %v1044 = vadd.f32 %v1030, %v1039
    %v1045 = vadd.f32 %v1031, %v1041
    %s1046 = sld [smem:[#allocation3 + $0x6d]]
    %v1047 = vstv %s1046
    %v1048 = vmul.f32 %v34, %v1047
    %v1049 = vmul.f32 %v35, %v1047
    %1052 = vrot.lane.b32.xlu0 %v1048, 125
    %v1053 = vpop.permute.xlu0 %1052
    %1054 = vrot.lane.b32.xlu0 %v1049, 125
    %v1055 = vpop.permute.xlu0 %1054
    %v1058 = vadd.f32 %v1044, %v1053
    %v1059 = vadd.f32 %v1045, %v1055
    %s1060 = sld [smem:[#allocation3 + $0x75]]
    %v1061 = vstv %s1060
    %v1062 = vadd.f32 %v1058, %v1061
    %v1063 = vadd.f32 %v1059, %v1061
    %v1064 = vtanh.pop %v1062
    %v1065 = vtanh.pop %v1063
    %s1066 = sld [smem:[#allocation3 + $0x7d]]
    %v1067 = vstv %s1066
    %v1068 = vmul.f32 %v1064, %v1067
    %v1069 = vmul.f32 %v1065, %v1067
    %v1070 = vadd.f32 %v1012, %v1068
    %v1071 = vadd.f32 %v1013, %v1069
    %s1072 = sld [smem:[#allocation3 + $0x56]]
    %v1073 = vstv %s1072
    %v1074 = vmul.f32 %v34, %v1073
    %v1075 = vmul.f32 %v35, %v1073
    %s1076 = sld [smem:[#allocation3 + $0x5e]]
    %v1077 = vstv %s1076
    %v1078 = vmul.f32 %v34, %v1077
    %v1079 = vmul.f32 %v35, %v1077
    %1082 = vrot.lane.b32.xlu0 %v1078, 127
    %v1083 = vpop.permute.xlu0 %1082
    %1084 = vrot.lane.b32.xlu0 %v1079, 127
    %v1085 = vpop.permute.xlu0 %1084
    %v1088 = vadd.f32 %v1074, %v1083
    %v1089 = vadd.f32 %v1075, %v1085
    %s1090 = sld [smem:[#allocation3 + $0x66]]
    %v1091 = vstv %s1090
    %v1092 = vmul.f32 %v34, %v1091
    %v1093 = vmul.f32 %v35, %v1091
    %1096 = vrot.lane.b32.xlu0 %v1092, 126
    %v1097 = vpop.permute.xlu0 %1096
    %1098 = vrot.lane.b32.xlu0 %v1093, 126
    %v1099 = vpop.permute.xlu0 %1098
    %v1102 = vadd.f32 %v1088, %v1097
    %v1103 = vadd.f32 %v1089, %v1099
    %s1104 = sld [smem:[#allocation3 + $0x6e]]
    %v1105 = vstv %s1104
    %v1106 = vmul.f32 %v34, %v1105
    %v1107 = vmul.f32 %v35, %v1105
    %1110 = vrot.lane.b32.xlu0 %v1106, 125
    %v1111 = vpop.permute.xlu0 %1110
    %1112 = vrot.lane.b32.xlu0 %v1107, 125
    %v1113 = vpop.permute.xlu0 %1112
    %v1116 = vadd.f32 %v1102, %v1111
    %v1117 = vadd.f32 %v1103, %v1113
    %s1118 = sld [smem:[#allocation3 + $0x76]]
    %v1119 = vstv %s1118
    %v1120 = vadd.f32 %v1116, %v1119
    %v1121 = vadd.f32 %v1117, %v1119
    %v1122 = vtanh.pop %v1120
    %v1123 = vtanh.pop %v1121
    %s1124 = sld [smem:[#allocation3 + $0x7e]]
    %v1125 = vstv %s1124
    %v1126 = vmul.f32 %v1122, %v1125
    %v1127 = vmul.f32 %v1123, %v1125
    %v1128 = vadd.f32 %v1070, %v1126
    %v1129 = vadd.f32 %v1071, %v1127
    %s1130 = sld [smem:[#allocation3 + $0x57]]
    %v1131 = vstv %s1130
    %v1132 = vmul.f32 %v34, %v1131
    %v1133 = vmul.f32 %v35, %v1131
    %s1134 = sld [smem:[#allocation3 + $0x5f]]
    %v1135 = vstv %s1134
    %v1136 = vmul.f32 %v34, %v1135
    %v1137 = vmul.f32 %v35, %v1135
    %1140 = vrot.lane.b32.xlu0 %v1136, 127
    %v1141 = vpop.permute.xlu0 %1140
    %1142 = vrot.lane.b32.xlu0 %v1137, 127
    %v1143 = vpop.permute.xlu0 %1142
    %v1146 = vadd.f32 %v1132, %v1141
    %v1147 = vadd.f32 %v1133, %v1143
    %s1148 = sld [smem:[#allocation3 + $0x67]]
    %v1149 = vstv %s1148
    %v1150 = vmul.f32 %v34, %v1149
    %v1151 = vmul.f32 %v35, %v1149
    %1154 = vrot.lane.b32.xlu0 %v1150, 126
    %v1155 = vpop.permute.xlu0 %1154
    %1156 = vrot.lane.b32.xlu0 %v1151, 126
    %v1157 = vpop.permute.xlu0 %1156
    %v1160 = vadd.f32 %v1146, %v1155
    %v1161 = vadd.f32 %v1147, %v1157
    %s1162 = sld [smem:[#allocation3 + $0x6f]]
    %v1163 = vstv %s1162
    %v1164 = vmul.f32 %v34, %v1163
    %v1165 = vmul.f32 %v35, %v1163
    %1168 = vrot.lane.b32.xlu0 %v1164, 125
    %v1169 = vpop.permute.xlu0 %1168
    %1170 = vrot.lane.b32.xlu0 %v1165, 125
    %v1171 = vpop.permute.xlu0 %1170
    %v1174 = vadd.f32 %v1160, %v1169
    %v1175 = vadd.f32 %v1161, %v1171
    %s1176 = sld [smem:[#allocation3 + $0x77]]
    %v1177 = vstv %s1176
    %v1178 = vadd.f32 %v1174, %v1177
    %v1179 = vadd.f32 %v1175, %v1177
    %v1180 = vtanh.pop %v1178
    %v1181 = vtanh.pop %v1179
    %s1182 = sld [smem:[#allocation3 + $0x7f]]
    %v1183 = vstv %s1182
    %v1184 = vmul.f32 %v1180, %v1183
    %v1185 = vmul.f32 %v1181, %v1183
    %v1186 = vadd.f32 %v1128, %v1184
    %v1187 = vadd.f32 %v1129, %v1185
    %s1188 = sld [smem:[#allocation3 + $0x58]]
    %v1189 = vstv %s1188
    %v1190 = vmul.f32 %v34, %v1189
    %v1191 = vmul.f32 %v35, %v1189
    %s1192 = sld [smem:[#allocation3 + $0x60]]
    %v1193 = vstv %s1192
    %v1194 = vmul.f32 %v34, %v1193
    %v1195 = vmul.f32 %v35, %v1193
    %1198 = vrot.lane.b32.xlu0 %v1194, 127
    %v1199 = vpop.permute.xlu0 %1198
    %1200 = vrot.lane.b32.xlu0 %v1195, 127
    %v1201 = vpop.permute.xlu0 %1200
    %v1204 = vadd.f32 %v1190, %v1199
    %v1205 = vadd.f32 %v1191, %v1201
    %s1206 = sld [smem:[#allocation3 + $0x68]]
    %v1207 = vstv %s1206
    %v1208 = vmul.f32 %v34, %v1207
    %v1209 = vmul.f32 %v35, %v1207
    %1212 = vrot.lane.b32.xlu0 %v1208, 126
    %v1213 = vpop.permute.xlu0 %1212
    %1214 = vrot.lane.b32.xlu0 %v1209, 126
    %v1215 = vpop.permute.xlu0 %1214
    %v1218 = vadd.f32 %v1204, %v1213
    %v1219 = vadd.f32 %v1205, %v1215
    %s1220 = sld [smem:[#allocation3 + $0x70]]
    %v1221 = vstv %s1220
    %v1222 = vmul.f32 %v34, %v1221
    %v1223 = vmul.f32 %v35, %v1221
    %1226 = vrot.lane.b32.xlu0 %v1222, 125
    %v1227 = vpop.permute.xlu0 %1226
    %1228 = vrot.lane.b32.xlu0 %v1223, 125
    %v1229 = vpop.permute.xlu0 %1228
    %v1232 = vadd.f32 %v1218, %v1227
    %v1233 = vadd.f32 %v1219, %v1229
    %s1234 = sld [smem:[#allocation3 + $0x78]]
    %v1235 = vstv %s1234
    %v1236 = vadd.f32 %v1232, %v1235
    %v1237 = vadd.f32 %v1233, %v1235
    %v1238 = vtanh.pop %v1236
    %v1239 = vtanh.pop %v1237
    %s1240 = sld [smem:[#allocation3 + $0x80]]
    %v1241 = vstv %s1240
    %v1242 = vmul.f32 %v1238, %v1241
    %v1243 = vmul.f32 %v1239, %v1241
    %v1244 = vadd.f32 %v1186, %v1242
    %v1245 = vadd.f32 %v1187, %v1243
    %s1246 = sld [smem:[#allocation3 + $0x81]]
    %v1247 = vstv %s1246
    %v1248 = vadd.f32 %v1244, %v1247
    %v1249 = vadd.f32 %v1245, %v1247
    %v1250 = vtanh.pop %v1248
    %v1251 = vtanh.pop %v1249
    %v1252 = vmul.f32 %v34, 1.442695
    %v1253 = vpow.pop %v1252
    %v1254 = vmul.f32 %v35, 1.442695
    %v1255 = vpow.pop %v1254
    %v1256 = vmul.f32 %v1253, 3.0
    %v1257 = vmul.f32 %v1255, 3.0
    %v1258 = vmul.f32 %v42, 1.5
    %v1259 = vmul.f32 %v43, 1.5
    %v1260 = vadd.f32 %v1258, 5.0
    %v1261 = vadd.f32 %v1259, 5.0
    %1262 = vrot.lane.b32.xlu0 %v782, 1
    %v1263 = vpop.permute.xlu0 %1262
    %1264 = vrot.lane.b32.xlu0 %v783, 1
    %v1265 = vpop.permute.xlu0 %1264
    %1266 = vrot.lane.b32.xlu0 %v782, 127
    %v1267 = vpop.permute.xlu0 %1266
    %1268 = vrot.lane.b32.xlu0 %v783, 127
    %v1269 = vpop.permute.xlu0 %1268
    %v1270 = vsub.f32 %v1263, %v1267
    %v1271 = vsub.f32 %v1265, %v1269
    %v1272 = vmul.f32 %v1260, %v1270
    %v1273 = vmul.f32 %v1261, %v1271
    %1274 = vadd.xlane.f32.xlu0 %v1272
    %v1275 = vpop.xlane.xlu0 %1274
    %1276 = vadd.xlane.f32.xlu0 %v1273
    %v1277 = vpop.xlane.xlu0 %1276
    %v1278 = vmul.f32 %v1275, 2.0
    %v1279 = vmul.f32 %v1277, 2.0
    %v1280 = vmul.f32 %v1250, 0.1
    %v1281 = vmul.f32 %v1251, 0.1
    %v1282 = vadd.f32 %v1280, 0.5
    %v1283 = vadd.f32 %v1281, 0.5
    %v1284 = vmul.f32 %v1256, %v1282
    %v1285 = vmul.f32 %v1257, %v1283
    %v1286 = vand.u32 2147483647, %v1278
    %v1287 = vand.u32 2147483647, %v1279
    %v1288 = vmul.f32 %v1284, %v1286
    %v1289 = vmul.f32 %v1285, %v1287
    %v1290 = vlog2.pop %v1288
    %v1291 = vmul.f32 %v1290, 0.6931472
    %v1292 = vlog2.pop %v1289
    %v1293 = vmul.f32 %v1292, 0.6931472
    %vm1294 = vcmask 7168
    %1295 = vst.msk [vmem:[%s3] sm:$0xff] %vm1294, %v1291
    %1296 = vst.msk [vmem:[%s3 + $0x8] sm:$0xff] %vm1294, %v1293
    %1297 = vxpose.xlu0.b32.start [1/16] %v782, 128
    %1298 = vxpose.xlu0.b32.cont [2/16] %v783, 128
    %1299 = vxpose.xlu0.b32.cont [3/16] 0.0, 128
    %1300 = vxpose.xlu0.b32.cont [4/16] 0.0, 128
    %1301 = vxpose.xlu0.b32.cont [5/16] 0.0, 128
    %1302 = vxpose.xlu0.b32.cont [6/16] 0.0, 128
    %1303 = vxpose.xlu0.b32.cont [7/16] 0.0, 128
    %1304 = vxpose.xlu0.b32.cont [8/16] 0.0, 128
    %1305 = vxpose.xlu0.b32.cont [9/16] 0.0, 128
    %1306 = vxpose.xlu0.b32.cont [10/16] 0.0, 128
    %1307 = vxpose.xlu0.b32.cont [11/16] 0.0, 128
    %1308 = vxpose.xlu0.b32.cont [12/16] 0.0, 128
    %1309 = vxpose.xlu0.b32.cont [13/16] 0.0, 128
    %1310 = vxpose.xlu0.b32.cont [14/16] 0.0, 128
    %1311 = vxpose.xlu0.b32.cont [15/16] 0.0, 128
    %1312 = vxpose.xlu0.b32.end [16/16] 0.0, 128
    %v1313 = vpop.trf.xlu0
    %v1314 = vpop.trf.xlu0
    %v1315 = vpop.trf.xlu0
    %v1316 = vpop.trf.xlu0
    %v1317 = vpop.trf.xlu0
    %v1318 = vpop.trf.xlu0
    %v1319 = vpop.trf.xlu0
    %v1320 = vpop.trf.xlu0
    %v1321 = vpop.trf.xlu0
    %v1322 = vpop.trf.xlu0
    %v1323 = vpop.trf.xlu0
    %v1324 = vpop.trf.xlu0
    %v1325 = vpop.trf.xlu0
    %v1326 = vpop.trf.xlu0
    %v1327 = vpop.trf.xlu0
    %v1328 = vpop.trf.xlu0
    %vm1329 = vcmask 130048
    %1330 = vst.msk [vmem:[%s4] sm:$0xff] %vm1329, %v1313
    %1331 = vst.msk [vmem:[%s4 + $0x8] sm:$0xff] %vm1329, %v1314
    %1332 = vst.msk [vmem:[%s4 + $0x10] sm:$0xff] %vm1329, %v1315
    %1333 = vst.msk [vmem:[%s4 + $0x18] sm:$0xff] %vm1329, %v1316
    %1334 = vst.msk [vmem:[%s4 + $0x20] sm:$0xff] %vm1329, %v1317
    %1335 = vst.msk [vmem:[%s4 + $0x28] sm:$0xff] %vm1329, %v1318
    %1336 = vst.msk [vmem:[%s4 + $0x30] sm:$0xff] %vm1329, %v1319
    %1337 = vst.msk [vmem:[%s4 + $0x38] sm:$0xff] %vm1329, %v1320
    %1338 = vst.msk [vmem:[%s4 + $0x40] sm:$0xff] %vm1329, %v1321
    %1339 = vst.msk [vmem:[%s4 + $0x48] sm:$0xff] %vm1329, %v1322
    %1340 = vst.msk [vmem:[%s4 + $0x50] sm:$0xff] %vm1329, %v1323
    %1341 = vst.msk [vmem:[%s4 + $0x58] sm:$0xff] %vm1329, %v1324
    %1342 = vst.msk [vmem:[%s4 + $0x60] sm:$0xff] %vm1329, %v1325
    %1343 = vst.msk [vmem:[%s4 + $0x68] sm:$0xff] %vm1329, %v1326
    %1344 = vst.msk [vmem:[%s4 + $0x70] sm:$0xff] %vm1329, %v1327
    %1345 = vst.msk [vmem:[%s4 + $0x78] sm:$0xff] %vm1329, %v1328
    // Predicated region
    $region14: #{tpu_custom_call.1} parent=1 // pred_check
      _
    $region15: #{tpu_custom_call.1} parent=1 // pred_check_branch
      %1347 = sbr.rel (0) target = $region17
    $region16: #{tpu_custom_call.1} parent=1 // pred_region
      _
    $region17: #{tpu_custom_call.1} parent=1 // pred_fallthru
      _
    // Predicated region
    $region18: #{tpu_custom_call.1} parent=1 // pred_check
      _
    $region19: #{tpu_custom_call.1} parent=1 // pred_check_branch
      %1349 = sbr.rel (0) target = $region21
    $region20: #{tpu_custom_call.1} parent=1 // pred_region
      _
    $region21: #{tpu_custom_call.1} parent=1 // pred_fallthru
      _
    // Predicated region
    $region22: #{tpu_custom_call.1} parent=1 // pred_check
      _
    $region23: #{tpu_custom_call.1} parent=1 // pred_check_branch
      %1351 = sbr.rel (0) target = $region25
    $region24: #{tpu_custom_call.1} parent=1 // pred_region
      _
    $region25: #{tpu_custom_call.1} parent=1 // pred_fallthru
      _
    // Predicated region
    $region26: #{tpu_custom_call.1} parent=1 // pred_check
      _
    $region27: #{tpu_custom_call.1} parent=1 // pred_check_branch
      %1353 = sbr.rel (0) target = $region29
    $region28: #{tpu_custom_call.1} parent=1 // pred_region
      _
    $region29: #{tpu_custom_call.1} parent=1 // pred_fallthru
      _
    %1354 = vsyncpa [#allocation5], 1

</llo_original>
